<compile_context>
chip_gen: v6e
topology: v6e:2x2x1
jax: 0.10.0
libtpu: 0.0.40
codegen_flags: <defaults>
</compile_context>

<pallas_src>
import jax
import jax.numpy as jnp
from jax.experimental import pallas as pl
from jax.experimental.pallas import tpu as pltpu

# Small, forward-consistent shapes (module defaults 5/300/300/2, scaled down).
BATCH = 2            # batch_size (real rows)
BATCH_PAD = 8        # padded to a full sublane group (vreg = 8 x 128)
SEQ = 8              # sentence length
EMBED = 32           # embedding_length
HIDDEN = 32          # hidden_size
OUTPUT = 2           # output_size
VOCAB = 50           # vocab_size
NUM_NETS = 2         # {target, active}


def _critic_lstm_kernel(ids_ref,                                    # SMEM [B, T] int32 (scalar prefetch)
                        emb_ref, wih_ref, whh_ref, b_ref,           # per-net params (leading net dim = 1)
                        wlab_ref, blab_ref,
                        out_ref,
                        x_scr):
    """One grid step == one full LSTMClassifier forward for one network."""
    H = HIDDEN

    # ---- fused embedding gather: token ids -> time-major padded [T*Bp, E] ----
    x_scr[...] = jnp.zeros_like(x_scr)                 # pad rows stay zero
    for t in range(SEQ):                               # fully static / unrolled
        for b in range(BATCH):
            tok = ids_ref[b, t]                        # scalar read from SMEM
            row = t * BATCH_PAD + b
            x_scr[row:row + 1, :] = emb_ref[0, pl.ds(tok, 1), :]

    # ---- hoisted input projection: one (T*Bp, E) @ (E, 4H) matmul + bias ----
    xw = (jnp.dot(x_scr[...], wih_ref[0], preferred_element_type=jnp.float32)
          + b_ref[0])                                  # [T*Bp, 4H]

    w_hh = whh_ref[0]                                  # [H, 4H]

    # ---- unrolled recurrence; h/c kept in vregs ----
    h = jnp.zeros((BATCH_PAD, H), jnp.float32)
    c = jnp.zeros((BATCH_PAD, H), jnp.float32)
    for t in range(SEQ):
        gates = xw[t * BATCH_PAD:(t + 1) * BATCH_PAD, :] + jnp.dot(
            h, w_hh, preferred_element_type=jnp.float32)            # [Bp, 4H]
        # PyTorch gate order along the 4H axis: i, f, g, o.
        i_g = jax.nn.sigmoid(gates[:, 0 * H:1 * H])
        f_g = jax.nn.sigmoid(gates[:, 1 * H:2 * H])
        g_g = jnp.tanh(gates[:, 2 * H:3 * H])
        o_g = jax.nn.sigmoid(gates[:, 3 * H:4 * H])
        c = f_g * c + i_g * g_g
        h = o_g * jnp.tanh(c)

    # ---- fused classifier head: logits = h_T @ W_label^T + b_label ----
    logits = (jnp.dot(h, wlab_ref[0], preferred_element_type=jnp.float32)
              + blab_ref[0])                                         # [Bp, O]
    out_ref[0] = logits.astype(out_ref.dtype)


@jax.jit
def critic_forward_all(stacked_params, x_tokens):
    """Runs BOTH networks (index 0 = target, 1 = active) in one pallas_call.

    x_tokens: [B, T] int32 token ids.  Returns [NUM_NETS, B, O] float32 logits.
    """
    out = pl.pallas_call(
        _critic_lstm_kernel,
        out_shape=jax.ShapeDtypeStruct((NUM_NETS, BATCH_PAD, OUTPUT), jnp.float32),
        grid_spec=pltpu.PrefetchScalarGridSpec(
            num_scalar_prefetch=1,                     # token ids -> SMEM
            grid=(NUM_NETS,),
            in_specs=[
                pl.BlockSpec((1, VOCAB, EMBED), lambda n, ids: (n, 0, 0)),       # embedding table
                pl.BlockSpec((1, EMBED, 4 * HIDDEN), lambda n, ids: (n, 0, 0)),  # W_ih fused (E,4H)
                pl.BlockSpec((1, HIDDEN, 4 * HIDDEN), lambda n, ids: (n, 0, 0)), # W_hh fused (H,4H)
                pl.BlockSpec((1, 1, 4 * HIDDEN), lambda n, ids: (n, 0, 0)),      # b_ih + b_hh
                pl.BlockSpec((1, HIDDEN, OUTPUT), lambda n, ids: (n, 0, 0)),     # label weight (H,O)
                pl.BlockSpec((1, 1, OUTPUT), lambda n, ids: (n, 0, 0)),          # label bias
            ],
            out_specs=pl.BlockSpec((1, BATCH_PAD, OUTPUT), lambda n, ids: (n, 0, 0)),
            scratch_shapes=[
                pltpu.VMEM((SEQ * BATCH_PAD, EMBED), jnp.float32),   # gathered embeddings
            ],
        ),
        compiler_params=pltpu.CompilerParams(
            dimension_semantics=("parallel",),         # target/active on separate cores (v7x)
        ),
    )(x_tokens,
      stacked_params["embedding"], stacked_params["w_ih"], stacked_params["w_hh"],
      stacked_params["bias"], stacked_params["w_label"], stacked_params["b_label"])
    return out[:, :BATCH, :]                           # drop sublane padding rows


def make_lstm_classifier_params(key, vocab, embed, hidden, output):
    """Deterministic synthetic parameters in PyTorch layout, fused for the kernel."""
    ks = jax.random.split(key, 7)
    scale = 0.1
    embedding = jax.random.normal(ks[0], (vocab, embed), jnp.float32) * scale
    # PyTorch nn.LSTM params: weight_ih_l0 [4H, E], weight_hh_l0 [4H, H],
    # bias_ih_l0 [4H], bias_hh_l0 [4H]  (gate order i, f, g, o along 4H).
    w_ih = jax.random.normal(ks[1], (4 * hidden, embed), jnp.float32) * scale
    w_hh = jax.random.normal(ks[2], (4 * hidden, hidden), jnp.float32) * scale
    b_ih = jax.random.normal(ks[3], (4 * hidden,), jnp.float32) * scale
    b_hh = jax.random.normal(ks[4], (4 * hidden,), jnp.float32) * scale
    # Linear head: weight [O, H], bias [O].
    w_label = jax.random.normal(ks[5], (output, hidden), jnp.float32) * scale
    b_label = jax.random.normal(ks[6], (output,), jnp.float32) * scale
    return {
        "embedding": embedding,                            # [V, E]
        "w_ih": w_ih.T,                                    # [E, 4H] (gate order preserved)
        "w_hh": w_hh.T,                                    # [H, 4H]
        "bias": (b_ih + b_hh).reshape(1, 4 * hidden),      # [1, 4H]
        "w_label": w_label.T,                              # [H, O]
        "b_label": b_label.reshape(1, output),             # [1, O]
    }


class Critic:
    """JAX/Pallas analogue of the PyTorch `critic` module (forward only)."""

    def __init__(self, key):
        k_t, k_a = jax.random.split(key)
        target = make_lstm_classifier_params(k_t, VOCAB, EMBED, HIDDEN, OUTPUT)
        active = make_lstm_classifier_params(k_a, VOCAB, EMBED, HIDDEN, OUTPUT)
        # Stack target (0) and active (1) so one pallas_call runs both behind a
        # parallel grid axis.
        self.stacked = jax.tree_util.tree_map(
            lambda a, b: jnp.stack([a, b], axis=0), target, active)
        self._scope_index = {"target": 0, "active": 1}

    def forward(self, x_tokens, scope):
        if scope not in self._scope_index:
            raise ValueError(f"unknown scope {scope!r}")
        out_all = critic_forward_all(self.stacked, x_tokens)
        return out_all[self._scope_index[scope]]

    # TODO(synk): assign/update_target_network, gradient copying and
    # getNextHiddenState are training-time / step-wise utilities outside the
    # forward hot path (soft update is a trivial elementwise tree_map in JAX).


if __name__ == "__main__":
    key = jax.random.PRNGKey(0)
    k_params, k_x = jax.random.split(key)
    critic_net = Critic(k_params)

    # Deterministic token-id input, shape [B, T].
    x = jax.random.randint(k_x, (BATCH, SEQ), 0, VOCAB, dtype=jnp.int32)

    out_target = critic_net.forward(x, "target")
    out_active = critic_net.forward(x, "active")
    jax.block_until_ready((out_target, out_active))

    assert out_target.shape == (BATCH, OUTPUT)
    assert out_active.shape == (BATCH, OUTPUT)
    print("KERNEL_OK")
</pallas_src>

<mosaic_0001>
module attributes {stable_mosaic.version = 11 : i64} {
  func.func @_critic_lstm_kernel(%arg0: i32, %arg1: memref<2x8xi32, #tpu.memory_space<smem>>, %arg2: memref<1x50x32xf32, #tpu.memory_space<vmem>>, %arg3: memref<1x32x128xf32, #tpu.memory_space<vmem>>, %arg4: memref<1x32x128xf32, #tpu.memory_space<vmem>>, %arg5: memref<1x1x128xf32, #tpu.memory_space<vmem>>, %arg6: memref<1x32x2xf32, #tpu.memory_space<vmem>>, %arg7: memref<1x1x2xf32, #tpu.memory_space<vmem>>, %arg8: memref<1x8x2xf32, #tpu.memory_space<vmem>>, %arg9: memref<64x32xf32, #tpu.memory_space<vmem>>) attributes {dimension_semantics = [#tpu.dimension_semantics<parallel>], iteration_bounds = array<i64: 2>, scalar_prefetch = 1 : i64, scratch_operands = 1 : i64, tpu.core_type = #tpu.core_type<tc>, window_params = [{transform_indices = @transform_0, window_bounds = array<i64: 1, 50, 32>}, {transform_indices = @transform_1, window_bounds = array<i64: 1, 32, 128>}, {transform_indices = @transform_2, window_bounds = array<i64: 1, 32, 128>}, {transform_indices = @transform_3, window_bounds = array<i64: 1, 1, 128>}, {transform_indices = @transform_4, window_bounds = array<i64: 1, 32, 2>}, {transform_indices = @transform_5, window_bounds = array<i64: 1, 1, 2>}, {transform_indices = @transform_6, window_bounds = array<i64: 1, 8, 2>}]} {
    %cst = arith.constant 0.000000e+00 : f32
    %0 = vector.broadcast %cst : f32 to vector<64x32xf32>
    %c0 = arith.constant 0 : index
    %c0_0 = arith.constant 0 : index
    %1 = vector.load %arg9[%c0, %c0_0] : memref<64x32xf32, #tpu.memory_space<vmem>>, vector<64x32xf32>
    tpu.vector_store %arg9[%c0, %c0_0], %0 {strides = array<i32>} : memref<64x32xf32, #tpu.memory_space<vmem>>, vector<64x32xf32>,
    %c0_1 = arith.constant 0 : index
    %c0_2 = arith.constant 0 : index
    %2 = memref.load %arg1[%c0_1, %c0_2] : memref<2x8xi32, #tpu.memory_space<smem>>
    %c0_3 = arith.constant 0 : index
    %3 = arith.index_cast %2 : i32 to index
    %c0_4 = arith.constant 0 : index
    %4 = vector.load %arg2[%c0_3, %3, %c0_4] : memref<1x50x32xf32, #tpu.memory_space<vmem>>, vector<1x1x32xf32>
    %5 = vector.shape_cast %4 : vector<1x1x32xf32> to vector<1x32xf32>
    %c0_5 = arith.constant 0 : index
    %c0_6 = arith.constant 0 : index
    %6 = vector.load %arg9[%c0_5, %c0_6] : memref<64x32xf32, #tpu.memory_space<vmem>>, vector<1x32xf32>
    tpu.vector_store %arg9[%c0_5, %c0_6], %5 {strides = array<i32>} : memref<64x32xf32, #tpu.memory_space<vmem>>, vector<1x32xf32>,
    %c1 = arith.constant 1 : index
    %c0_7 = arith.constant 0 : index
    %7 = memref.load %arg1[%c1, %c0_7] : memref<2x8xi32, #tpu.memory_space<smem>>
    %c0_8 = arith.constant 0 : index
    %8 = arith.index_cast %7 : i32 to index
    %c0_9 = arith.constant 0 : index
    %9 = vector.load %arg2[%c0_8, %8, %c0_9] : memref<1x50x32xf32, #tpu.memory_space<vmem>>, vector<1x1x32xf32>
    %10 = vector.shape_cast %9 : vector<1x1x32xf32> to vector<1x32xf32>
    %c1_10 = arith.constant 1 : index
    %c0_11 = arith.constant 0 : index
    %11 = vector.load %arg9[%c1_10, %c0_11] : memref<64x32xf32, #tpu.memory_space<vmem>>, vector<1x32xf32>
    tpu.vector_store %arg9[%c1_10, %c0_11], %10 {strides = array<i32>} : memref<64x32xf32, #tpu.memory_space<vmem>>, vector<1x32xf32>,
    %c0_12 = arith.constant 0 : index
    %c1_13 = arith.constant 1 : index
    %12 = memref.load %arg1[%c0_12, %c1_13] : memref<2x8xi32, #tpu.memory_space<smem>>
    %c0_14 = arith.constant 0 : index
    %13 = arith.index_cast %12 : i32 to index
    %c0_15 = arith.constant 0 : index
    %14 = vector.load %arg2[%c0_14, %13, %c0_15] : memref<1x50x32xf32, #tpu.memory_space<vmem>>, vector<1x1x32xf32>
    %15 = vector.shape_cast %14 : vector<1x1x32xf32> to vector<1x32xf32>
    %c8 = arith.constant 8 : index
    %c0_16 = arith.constant 0 : index
    %16 = vector.load %arg9[%c8, %c0_16] : memref<64x32xf32, #tpu.memory_space<vmem>>, vector<1x32xf32>
    tpu.vector_store %arg9[%c8, %c0_16], %15 {strides = array<i32>} : memref<64x32xf32, #tpu.memory_space<vmem>>, vector<1x32xf32>,
    %c1_17 = arith.constant 1 : index
    %c1_18 = arith.constant 1 : index
    %17 = memref.load %arg1[%c1_17, %c1_18] : memref<2x8xi32, #tpu.memory_space<smem>>
    %c0_19 = arith.constant 0 : index
    %18 = arith.index_cast %17 : i32 to index
    %c0_20 = arith.constant 0 : index
    %19 = vector.load %arg2[%c0_19, %18, %c0_20] : memref<1x50x32xf32, #tpu.memory_space<vmem>>, vector<1x1x32xf32>
    %20 = vector.shape_cast %19 : vector<1x1x32xf32> to vector<1x32xf32>
    %c9 = arith.constant 9 : index
    %c0_21 = arith.constant 0 : index
    %21 = vector.load %arg9[%c9, %c0_21] : memref<64x32xf32, #tpu.memory_space<vmem>>, vector<1x32xf32>
    tpu.vector_store %arg9[%c9, %c0_21], %20 {strides = array<i32>} : memref<64x32xf32, #tpu.memory_space<vmem>>, vector<1x32xf32>,
    %c0_22 = arith.constant 0 : index
    %c2 = arith.constant 2 : index
    %22 = memref.load %arg1[%c0_22, %c2] : memref<2x8xi32, #tpu.memory_space<smem>>
    %c0_23 = arith.constant 0 : index
    %23 = arith.index_cast %22 : i32 to index
    %c0_24 = arith.constant 0 : index
    %24 = vector.load %arg2[%c0_23, %23, %c0_24] : memref<1x50x32xf32, #tpu.memory_space<vmem>>, vector<1x1x32xf32>
    %25 = vector.shape_cast %24 : vector<1x1x32xf32> to vector<1x32xf32>
    %c16 = arith.constant 16 : index
    %c0_25 = arith.constant 0 : index
    %26 = vector.load %arg9[%c16, %c0_25] : memref<64x32xf32, #tpu.memory_space<vmem>>, vector<1x32xf32>
    tpu.vector_store %arg9[%c16, %c0_25], %25 {strides = array<i32>} : memref<64x32xf32, #tpu.memory_space<vmem>>, vector<1x32xf32>,
    %c1_26 = arith.constant 1 : index
    %c2_27 = arith.constant 2 : index
    %27 = memref.load %arg1[%c1_26, %c2_27] : memref<2x8xi32, #tpu.memory_space<smem>>
    %c0_28 = arith.constant 0 : index
    %28 = arith.index_cast %27 : i32 to index
    %c0_29 = arith.constant 0 : index
    %29 = vector.load %arg2[%c0_28, %28, %c0_29] : memref<1x50x32xf32, #tpu.memory_space<vmem>>, vector<1x1x32xf32>
    %30 = vector.shape_cast %29 : vector<1x1x32xf32> to vector<1x32xf32>
    %c17 = arith.constant 17 : index
    %c0_30 = arith.constant 0 : index
    %31 = vector.load %arg9[%c17, %c0_30] : memref<64x32xf32, #tpu.memory_space<vmem>>, vector<1x32xf32>
    tpu.vector_store %arg9[%c17, %c0_30], %30 {strides = array<i32>} : memref<64x32xf32, #tpu.memory_space<vmem>>, vector<1x32xf32>,
    %c0_31 = arith.constant 0 : index
    %c3 = arith.constant 3 : index
    %32 = memref.load %arg1[%c0_31, %c3] : memref<2x8xi32, #tpu.memory_space<smem>>
    %c0_32 = arith.constant 0 : index
    %33 = arith.index_cast %32 : i32 to index
    %c0_33 = arith.constant 0 : index
    %34 = vector.load %arg2[%c0_32, %33, %c0_33] : memref<1x50x32xf32, #tpu.memory_space<vmem>>, vector<1x1x32xf32>
    %35 = vector.shape_cast %34 : vector<1x1x32xf32> to vector<1x32xf32>
    %c24 = arith.constant 24 : index
    %c0_34 = arith.constant 0 : index
    %36 = vector.load %arg9[%c24, %c0_34] : memref<64x32xf32, #tpu.memory_space<vmem>>, vector<1x32xf32>
    tpu.vector_store %arg9[%c24, %c0_34], %35 {strides = array<i32>} : memref<64x32xf32, #tpu.memory_space<vmem>>, vector<1x32xf32>,
    %c1_35 = arith.constant 1 : index
    %c3_36 = arith.constant 3 : index
    %37 = memref.load %arg1[%c1_35, %c3_36] : memref<2x8xi32, #tpu.memory_space<smem>>
    %c0_37 = arith.constant 0 : index
    %38 = arith.index_cast %37 : i32 to index
    %c0_38 = arith.constant 0 : index
    %39 = vector.load %arg2[%c0_37, %38, %c0_38] : memref<1x50x32xf32, #tpu.memory_space<vmem>>, vector<1x1x32xf32>
    %40 = vector.shape_cast %39 : vector<1x1x32xf32> to vector<1x32xf32>
    %c25 = arith.constant 25 : index
    %c0_39 = arith.constant 0 : index
    %41 = vector.load %arg9[%c25, %c0_39] : memref<64x32xf32, #tpu.memory_space<vmem>>, vector<1x32xf32>
    tpu.vector_store %arg9[%c25, %c0_39], %40 {strides = array<i32>} : memref<64x32xf32, #tpu.memory_space<vmem>>, vector<1x32xf32>,
    %c0_40 = arith.constant 0 : index
    %c4 = arith.constant 4 : index
    %42 = memref.load %arg1[%c0_40, %c4] : memref<2x8xi32, #tpu.memory_space<smem>>
    %c0_41 = arith.constant 0 : index
    %43 = arith.index_cast %42 : i32 to index
    %c0_42 = arith.constant 0 : index
    %44 = vector.load %arg2[%c0_41, %43, %c0_42] : memref<1x50x32xf32, #tpu.memory_space<vmem>>, vector<1x1x32xf32>
    %45 = vector.shape_cast %44 : vector<1x1x32xf32> to vector<1x32xf32>
    %c32 = arith.constant 32 : index
    %c0_43 = arith.constant 0 : index
    %46 = vector.load %arg9[%c32, %c0_43] : memref<64x32xf32, #tpu.memory_space<vmem>>, vector<1x32xf32>
    tpu.vector_store %arg9[%c32, %c0_43], %45 {strides = array<i32>} : memref<64x32xf32, #tpu.memory_space<vmem>>, vector<1x32xf32>,
    %c1_44 = arith.constant 1 : index
    %c4_45 = arith.constant 4 : index
    %47 = memref.load %arg1[%c1_44, %c4_45] : memref<2x8xi32, #tpu.memory_space<smem>>
    %c0_46 = arith.constant 0 : index
    %48 = arith.index_cast %47 : i32 to index
    %c0_47 = arith.constant 0 : index
    %49 = vector.load %arg2[%c0_46, %48, %c0_47] : memref<1x50x32xf32, #tpu.memory_space<vmem>>, vector<1x1x32xf32>
    %50 = vector.shape_cast %49 : vector<1x1x32xf32> to vector<1x32xf32>
    %c33 = arith.constant 33 : index
    %c0_48 = arith.constant 0 : index
    %51 = vector.load %arg9[%c33, %c0_48] : memref<64x32xf32, #tpu.memory_space<vmem>>, vector<1x32xf32>
    tpu.vector_store %arg9[%c33, %c0_48], %50 {strides = array<i32>} : memref<64x32xf32, #tpu.memory_space<vmem>>, vector<1x32xf32>,
    %c0_49 = arith.constant 0 : index
    %c5 = arith.constant 5 : index
    %52 = memref.load %arg1[%c0_49, %c5] : memref<2x8xi32, #tpu.memory_space<smem>>
    %c0_50 = arith.constant 0 : index
    %53 = arith.index_cast %52 : i32 to index
    %c0_51 = arith.constant 0 : index
    %54 = vector.load %arg2[%c0_50, %53, %c0_51] : memref<1x50x32xf32, #tpu.memory_space<vmem>>, vector<1x1x32xf32>
    %55 = vector.shape_cast %54 : vector<1x1x32xf32> to vector<1x32xf32>
    %c40 = arith.constant 40 : index
    %c0_52 = arith.constant 0 : index
    %56 = vector.load %arg9[%c40, %c0_52] : memref<64x32xf32, #tpu.memory_space<vmem>>, vector<1x32xf32>
    tpu.vector_store %arg9[%c40, %c0_52], %55 {strides = array<i32>} : memref<64x32xf32, #tpu.memory_space<vmem>>, vector<1x32xf32>,
    %c1_53 = arith.constant 1 : index
    %c5_54 = arith.constant 5 : index
    %57 = memref.load %arg1[%c1_53, %c5_54] : memref<2x8xi32, #tpu.memory_space<smem>>
    %c0_55 = arith.constant 0 : index
    %58 = arith.index_cast %57 : i32 to index
    %c0_56 = arith.constant 0 : index
    %59 = vector.load %arg2[%c0_55, %58, %c0_56] : memref<1x50x32xf32, #tpu.memory_space<vmem>>, vector<1x1x32xf32>
    %60 = vector.shape_cast %59 : vector<1x1x32xf32> to vector<1x32xf32>
    %c41 = arith.constant 41 : index
    %c0_57 = arith.constant 0 : index
    %61 = vector.load %arg9[%c41, %c0_57] : memref<64x32xf32, #tpu.memory_space<vmem>>, vector<1x32xf32>
    tpu.vector_store %arg9[%c41, %c0_57], %60 {strides = array<i32>} : memref<64x32xf32, #tpu.memory_space<vmem>>, vector<1x32xf32>,
    %c0_58 = arith.constant 0 : index
    %c6 = arith.constant 6 : index
    %62 = memref.load %arg1[%c0_58, %c6] : memref<2x8xi32, #tpu.memory_space<smem>>
    %c0_59 = arith.constant 0 : index
    %63 = arith.index_cast %62 : i32 to index
    %c0_60 = arith.constant 0 : index
    %64 = vector.load %arg2[%c0_59, %63, %c0_60] : memref<1x50x32xf32, #tpu.memory_space<vmem>>, vector<1x1x32xf32>
    %65 = vector.shape_cast %64 : vector<1x1x32xf32> to vector<1x32xf32>
    %c48 = arith.constant 48 : index
    %c0_61 = arith.constant 0 : index
    %66 = vector.load %arg9[%c48, %c0_61] : memref<64x32xf32, #tpu.memory_space<vmem>>, vector<1x32xf32>
    tpu.vector_store %arg9[%c48, %c0_61], %65 {strides = array<i32>} : memref<64x32xf32, #tpu.memory_space<vmem>>, vector<1x32xf32>,
    %c1_62 = arith.constant 1 : index
    %c6_63 = arith.constant 6 : index
    %67 = memref.load %arg1[%c1_62, %c6_63] : memref<2x8xi32, #tpu.memory_space<smem>>
    %c0_64 = arith.constant 0 : index
    %68 = arith.index_cast %67 : i32 to index
    %c0_65 = arith.constant 0 : index
    %69 = vector.load %arg2[%c0_64, %68, %c0_65] : memref<1x50x32xf32, #tpu.memory_space<vmem>>, vector<1x1x32xf32>
    %70 = vector.shape_cast %69 : vector<1x1x32xf32> to vector<1x32xf32>
    %c49 = arith.constant 49 : index
    %c0_66 = arith.constant 0 : index
    %71 = vector.load %arg9[%c49, %c0_66] : memref<64x32xf32, #tpu.memory_space<vmem>>, vector<1x32xf32>
    tpu.vector_store %arg9[%c49, %c0_66], %70 {strides = array<i32>} : memref<64x32xf32, #tpu.memory_space<vmem>>, vector<1x32xf32>,
    %c0_67 = arith.constant 0 : index
    %c7 = arith.constant 7 : index
    %72 = memref.load %arg1[%c0_67, %c7] : memref<2x8xi32, #tpu.memory_space<smem>>
    %c0_68 = arith.constant 0 : index
    %73 = arith.index_cast %72 : i32 to index
    %c0_69 = arith.constant 0 : index
    %74 = vector.load %arg2[%c0_68, %73, %c0_69] : memref<1x50x32xf32, #tpu.memory_space<vmem>>, vector<1x1x32xf32>
    %75 = vector.shape_cast %74 : vector<1x1x32xf32> to vector<1x32xf32>
    %c56 = arith.constant 56 : index
    %c0_70 = arith.constant 0 : index
    %76 = vector.load %arg9[%c56, %c0_70] : memref<64x32xf32, #tpu.memory_space<vmem>>, vector<1x32xf32>
    tpu.vector_store %arg9[%c56, %c0_70], %75 {strides = array<i32>} : memref<64x32xf32, #tpu.memory_space<vmem>>, vector<1x32xf32>,
    %c1_71 = arith.constant 1 : index
    %c7_72 = arith.constant 7 : index
    %77 = memref.load %arg1[%c1_71, %c7_72] : memref<2x8xi32, #tpu.memory_space<smem>>
    %c0_73 = arith.constant 0 : index
    %78 = arith.index_cast %77 : i32 to index
    %c0_74 = arith.constant 0 : index
    %79 = vector.load %arg2[%c0_73, %78, %c0_74] : memref<1x50x32xf32, #tpu.memory_space<vmem>>, vector<1x1x32xf32>
    %80 = vector.shape_cast %79 : vector<1x1x32xf32> to vector<1x32xf32>
    %c57 = arith.constant 57 : index
    %c0_75 = arith.constant 0 : index
    %81 = vector.load %arg9[%c57, %c0_75] : memref<64x32xf32, #tpu.memory_space<vmem>>, vector<1x32xf32>
    tpu.vector_store %arg9[%c57, %c0_75], %80 {strides = array<i32>} : memref<64x32xf32, #tpu.memory_space<vmem>>, vector<1x32xf32>,
    %c0_76 = arith.constant 0 : index
    %c0_77 = arith.constant 0 : index
    %82 = vector.load %arg9[%c0_76, %c0_77] : memref<64x32xf32, #tpu.memory_space<vmem>>, vector<64x32xf32>
    %c0_78 = arith.constant 0 : index
    %c0_79 = arith.constant 0 : index
    %c0_80 = arith.constant 0 : index
    %83 = vector.load %arg3[%c0_78, %c0_79, %c0_80] : memref<1x32x128xf32, #tpu.memory_space<vmem>>, vector<1x32x128xf32>
    %84 = vector.shape_cast %83 : vector<1x32x128xf32> to vector<32x128xf32>
    %cst_81 = arith.constant dense<0.000000e+00> : vector<64x128xf32>
    %85 = tpu.matmul %82, %84, %cst_81 {dimension_numbers = #tpu.dot_dimension_numbers<[1], [0], [0], [1], [0, 0, 1, 1], [], []>} : vector<64x32xf32>, vector<32x128xf32>, vector<64x128xf32> -> vector<64x128xf32>
    %c0_82 = arith.constant 0 : index
    %c0_83 = arith.constant 0 : index
    %c0_84 = arith.constant 0 : index
    %86 = vector.load %arg5[%c0_82, %c0_83, %c0_84] : memref<1x1x128xf32, #tpu.memory_space<vmem>>, vector<1x1x128xf32>
    %87 = vector.shape_cast %86 : vector<1x1x128xf32> to vector<1x128xf32>
    %88 = vector.broadcast %87 : vector<1x128xf32> to vector<64x128xf32>
    %89 = arith.addf %85, %88 : vector<64x128xf32>
    %c0_85 = arith.constant 0 : index
    %c0_86 = arith.constant 0 : index
    %c0_87 = arith.constant 0 : index
    %90 = vector.load %arg4[%c0_85, %c0_86, %c0_87] : memref<1x32x128xf32, #tpu.memory_space<vmem>>, vector<1x32x128xf32>
    %91 = vector.shape_cast %90 : vector<1x32x128xf32> to vector<32x128xf32>
    %cst_88 = arith.constant 0.000000e+00 : f32
    %92 = vector.broadcast %cst_88 : f32 to vector<8x32xf32>
    %cst_89 = arith.constant 0.000000e+00 : f32
    %93 = vector.broadcast %cst_89 : f32 to vector<8x32xf32>
    %94 = vector.extract_strided_slice %89 {offsets = [0, 0], sizes = [8, 128], strides = [1, 1]} : vector<64x128xf32> to vector<8x128xf32>
    %cst_90 = arith.constant dense<0.000000e+00> : vector<8x128xf32>
    %95 = tpu.matmul %92, %91, %cst_90 {dimension_numbers = #tpu.dot_dimension_numbers<[1], [0], [0], [1], [0, 0, 1, 1], [], []>} : vector<8x32xf32>, vector<32x128xf32>, vector<8x128xf32> -> vector<8x128xf32>
    %96 = arith.addf %94, %95 : vector<8x128xf32>
    %97 = vector.extract_strided_slice %96 {offsets = [0, 0], sizes = [8, 32], strides = [1, 1]} : vector<8x128xf32> to vector<8x32xf32>
    %98 = arith.negf %97 : vector<8x32xf32>
    %99 = math.exp %98 : vector<8x32xf32>
    %cst_91 = arith.constant 1.000000e+00 : f32
    %100 = vector.broadcast %cst_91 : f32 to vector<8x32xf32>
    %101 = arith.addf %100, %99 : vector<8x32xf32>
    %102 = arith.divf %100, %101 : vector<8x32xf32>
    %103 = vector.extract_strided_slice %96 {offsets = [0, 32], sizes = [8, 32], strides = [1, 1]} : vector<8x128xf32> to vector<8x32xf32>
    %104 = arith.negf %103 : vector<8x32xf32>
    %105 = math.exp %104 : vector<8x32xf32>
    %cst_92 = arith.constant 1.000000e+00 : f32
    %106 = vector.broadcast %cst_92 : f32 to vector<8x32xf32>
    %107 = arith.addf %106, %105 : vector<8x32xf32>
    %108 = arith.divf %106, %107 : vector<8x32xf32>
    %109 = vector.extract_strided_slice %96 {offsets = [0, 64], sizes = [8, 32], strides = [1, 1]} : vector<8x128xf32> to vector<8x32xf32>
    %110 = math.tanh %109 : vector<8x32xf32>
    %111 = vector.extract_strided_slice %96 {offsets = [0, 96], sizes = [8, 32], strides = [1, 1]} : vector<8x128xf32> to vector<8x32xf32>
    %112 = arith.negf %111 : vector<8x32xf32>
    %113 = math.exp %112 : vector<8x32xf32>
    %cst_93 = arith.constant 1.000000e+00 : f32
    %114 = vector.broadcast %cst_93 : f32 to vector<8x32xf32>
    %115 = arith.addf %114, %113 : vector<8x32xf32>
    %116 = arith.divf %114, %115 : vector<8x32xf32>
    %117 = arith.mulf %108, %93 : vector<8x32xf32>
    %118 = arith.mulf %102, %110 : vector<8x32xf32>
    %119 = arith.addf %117, %118 : vector<8x32xf32>
    %120 = math.tanh %119 : vector<8x32xf32>
    %121 = arith.mulf %116, %120 : vector<8x32xf32>
    %122 = vector.extract_strided_slice %89 {offsets = [8, 0], sizes = [8, 128], strides = [1, 1]} : vector<64x128xf32> to vector<8x128xf32>
    %cst_94 = arith.constant dense<0.000000e+00> : vector<8x128xf32>
    %123 = tpu.matmul %121, %91, %cst_94 {dimension_numbers = #tpu.dot_dimension_numbers<[1], [0], [0], [1], [0, 0, 1, 1], [], []>} : vector<8x32xf32>, vector<32x128xf32>, vector<8x128xf32> -> vector<8x128xf32>
    %124 = arith.addf %122, %123 : vector<8x128xf32>
    %125 = vector.extract_strided_slice %124 {offsets = [0, 0], sizes = [8, 32], strides = [1, 1]} : vector<8x128xf32> to vector<8x32xf32>
    %126 = arith.negf %125 : vector<8x32xf32>
    %127 = math.exp %126 : vector<8x32xf32>
    %cst_95 = arith.constant 1.000000e+00 : f32
    %128 = vector.broadcast %cst_95 : f32 to vector<8x32xf32>
    %129 = arith.addf %128, %127 : vector<8x32xf32>
    %130 = arith.divf %128, %129 : vector<8x32xf32>
    %131 = vector.extract_strided_slice %124 {offsets = [0, 32], sizes = [8, 32], strides = [1, 1]} : vector<8x128xf32> to vector<8x32xf32>
    %132 = arith.negf %131 : vector<8x32xf32>
    %133 = math.exp %132 : vector<8x32xf32>
    %cst_96 = arith.constant 1.000000e+00 : f32
    %134 = vector.broadcast %cst_96 : f32 to vector<8x32xf32>
    %135 = arith.addf %134, %133 : vector<8x32xf32>
    %136 = arith.divf %134, %135 : vector<8x32xf32>
    %137 = vector.extract_strided_slice %124 {offsets = [0, 64], sizes = [8, 32], strides = [1, 1]} : vector<8x128xf32> to vector<8x32xf32>
    %138 = math.tanh %137 : vector<8x32xf32>
    %139 = vector.extract_strided_slice %124 {offsets = [0, 96], sizes = [8, 32], strides = [1, 1]} : vector<8x128xf32> to vector<8x32xf32>
    %140 = arith.negf %139 : vector<8x32xf32>
    %141 = math.exp %140 : vector<8x32xf32>
    %cst_97 = arith.constant 1.000000e+00 : f32
    %142 = vector.broadcast %cst_97 : f32 to vector<8x32xf32>
    %143 = arith.addf %142, %141 : vector<8x32xf32>
    %144 = arith.divf %142, %143 : vector<8x32xf32>
    %145 = arith.mulf %136, %119 : vector<8x32xf32>
    %146 = arith.mulf %130, %138 : vector<8x32xf32>
    %147 = arith.addf %145, %146 : vector<8x32xf32>
    %148 = math.tanh %147 : vector<8x32xf32>
    %149 = arith.mulf %144, %148 : vector<8x32xf32>
    %150 = vector.extract_strided_slice %89 {offsets = [16, 0], sizes = [8, 128], strides = [1, 1]} : vector<64x128xf32> to vector<8x128xf32>
    %cst_98 = arith.constant dense<0.000000e+00> : vector<8x128xf32>
    %151 = tpu.matmul %149, %91, %cst_98 {dimension_numbers = #tpu.dot_dimension_numbers<[1], [0], [0], [1], [0, 0, 1, 1], [], []>} : vector<8x32xf32>, vector<32x128xf32>, vector<8x128xf32> -> vector<8x128xf32>
    %152 = arith.addf %150, %151 : vector<8x128xf32>
    %153 = vector.extract_strided_slice %152 {offsets = [0, 0], sizes = [8, 32], strides = [1, 1]} : vector<8x128xf32> to vector<8x32xf32>
    %154 = arith.negf %153 : vector<8x32xf32>
    %155 = math.exp %154 : vector<8x32xf32>
    %cst_99 = arith.constant 1.000000e+00 : f32
    %156 = vector.broadcast %cst_99 : f32 to vector<8x32xf32>
    %157 = arith.addf %156, %155 : vector<8x32xf32>
    %158 = arith.divf %156, %157 : vector<8x32xf32>
    %159 = vector.extract_strided_slice %152 {offsets = [0, 32], sizes = [8, 32], strides = [1, 1]} : vector<8x128xf32> to vector<8x32xf32>
    %160 = arith.negf %159 : vector<8x32xf32>
    %161 = math.exp %160 : vector<8x32xf32>
    %cst_100 = arith.constant 1.000000e+00 : f32
    %162 = vector.broadcast %cst_100 : f32 to vector<8x32xf32>
    %163 = arith.addf %162, %161 : vector<8x32xf32>
    %164 = arith.divf %162, %163 : vector<8x32xf32>
    %165 = vector.extract_strided_slice %152 {offsets = [0, 64], sizes = [8, 32], strides = [1, 1]} : vector<8x128xf32> to vector<8x32xf32>
    %166 = math.tanh %165 : vector<8x32xf32>
    %167 = vector.extract_strided_slice %152 {offsets = [0, 96], sizes = [8, 32], strides = [1, 1]} : vector<8x128xf32> to vector<8x32xf32>
    %168 = arith.negf %167 : vector<8x32xf32>
    %169 = math.exp %168 : vector<8x32xf32>
    %cst_101 = arith.constant 1.000000e+00 : f32
    %170 = vector.broadcast %cst_101 : f32 to vector<8x32xf32>
    %171 = arith.addf %170, %169 : vector<8x32xf32>
    %172 = arith.divf %170, %171 : vector<8x32xf32>
    %173 = arith.mulf %164, %147 : vector<8x32xf32>
    %174 = arith.mulf %158, %166 : vector<8x32xf32>
    %175 = arith.addf %173, %174 : vector<8x32xf32>
    %176 = math.tanh %175 : vector<8x32xf32>
    %177 = arith.mulf %172, %176 : vector<8x32xf32>
    %178 = vector.extract_strided_slice %89 {offsets = [24, 0], sizes = [8, 128], strides = [1, 1]} : vector<64x128xf32> to vector<8x128xf32>
    %cst_102 = arith.constant dense<0.000000e+00> : vector<8x128xf32>
    %179 = tpu.matmul %177, %91, %cst_102 {dimension_numbers = #tpu.dot_dimension_numbers<[1], [0], [0], [1], [0, 0, 1, 1], [], []>} : vector<8x32xf32>, vector<32x128xf32>, vector<8x128xf32> -> vector<8x128xf32>
    %180 = arith.addf %178, %179 : vector<8x128xf32>
    %181 = vector.extract_strided_slice %180 {offsets = [0, 0], sizes = [8, 32], strides = [1, 1]} : vector<8x128xf32> to vector<8x32xf32>
    %182 = arith.negf %181 : vector<8x32xf32>
    %183 = math.exp %182 : vector<8x32xf32>
    %cst_103 = arith.constant 1.000000e+00 : f32
    %184 = vector.broadcast %cst_103 : f32 to vector<8x32xf32>
    %185 = arith.addf %184, %183 : vector<8x32xf32>
    %186 = arith.divf %184, %185 : vector<8x32xf32>
    %187 = vector.extract_strided_slice %180 {offsets = [0, 32], sizes = [8, 32], strides = [1, 1]} : vector<8x128xf32> to vector<8x32xf32>
    %188 = arith.negf %187 : vector<8x32xf32>
    %189 = math.exp %188 : vector<8x32xf32>
    %cst_104 = arith.constant 1.000000e+00 : f32
    %190 = vector.broadcast %cst_104 : f32 to vector<8x32xf32>
    %191 = arith.addf %190, %189 : vector<8x32xf32>
    %192 = arith.divf %190, %191 : vector<8x32xf32>
    %193 = vector.extract_strided_slice %180 {offsets = [0, 64], sizes = [8, 32], strides = [1, 1]} : vector<8x128xf32> to vector<8x32xf32>
    %194 = math.tanh %193 : vector<8x32xf32>
    %195 = vector.extract_strided_slice %180 {offsets = [0, 96], sizes = [8, 32], strides = [1, 1]} : vector<8x128xf32> to vector<8x32xf32>
    %196 = arith.negf %195 : vector<8x32xf32>
    %197 = math.exp %196 : vector<8x32xf32>
    %cst_105 = arith.constant 1.000000e+00 : f32
    %198 = vector.broadcast %cst_105 : f32 to vector<8x32xf32>
    %199 = arith.addf %198, %197 : vector<8x32xf32>
    %200 = arith.divf %198, %199 : vector<8x32xf32>
    %201 = arith.mulf %192, %175 : vector<8x32xf32>
    %202 = arith.mulf %186, %194 : vector<8x32xf32>
    %203 = arith.addf %201, %202 : vector<8x32xf32>
    %204 = math.tanh %203 : vector<8x32xf32>
    %205 = arith.mulf %200, %204 : vector<8x32xf32>
    %206 = vector.extract_strided_slice %89 {offsets = [32, 0], sizes = [8, 128], strides = [1, 1]} : vector<64x128xf32> to vector<8x128xf32>
    %cst_106 = arith.constant dense<0.000000e+00> : vector<8x128xf32>
    %207 = tpu.matmul %205, %91, %cst_106 {dimension_numbers = #tpu.dot_dimension_numbers<[1], [0], [0], [1], [0, 0, 1, 1], [], []>} : vector<8x32xf32>, vector<32x128xf32>, vector<8x128xf32> -> vector<8x128xf32>
    %208 = arith.addf %206, %207 : vector<8x128xf32>
    %209 = vector.extract_strided_slice %208 {offsets = [0, 0], sizes = [8, 32], strides = [1, 1]} : vector<8x128xf32> to vector<8x32xf32>
    %210 = arith.negf %209 : vector<8x32xf32>
    %211 = math.exp %210 : vector<8x32xf32>
    %cst_107 = arith.constant 1.000000e+00 : f32
    %212 = vector.broadcast %cst_107 : f32 to vector<8x32xf32>
    %213 = arith.addf %212, %211 : vector<8x32xf32>
    %214 = arith.divf %212, %213 : vector<8x32xf32>
    %215 = vector.extract_strided_slice %208 {offsets = [0, 32], sizes = [8, 32], strides = [1, 1]} : vector<8x128xf32> to vector<8x32xf32>
    %216 = arith.negf %215 : vector<8x32xf32>
    %217 = math.exp %216 : vector<8x32xf32>
    %cst_108 = arith.constant 1.000000e+00 : f32
    %218 = vector.broadcast %cst_108 : f32 to vector<8x32xf32>
    %219 = arith.addf %218, %217 : vector<8x32xf32>
    %220 = arith.divf %218, %219 : vector<8x32xf32>
    %221 = vector.extract_strided_slice %208 {offsets = [0, 64], sizes = [8, 32], strides = [1, 1]} : vector<8x128xf32> to vector<8x32xf32>
    %222 = math.tanh %221 : vector<8x32xf32>
    %223 = vector.extract_strided_slice %208 {offsets = [0, 96], sizes = [8, 32], strides = [1, 1]} : vector<8x128xf32> to vector<8x32xf32>
    %224 = arith.negf %223 : vector<8x32xf32>
    %225 = math.exp %224 : vector<8x32xf32>
    %cst_109 = arith.constant 1.000000e+00 : f32
    %226 = vector.broadcast %cst_109 : f32 to vector<8x32xf32>
    %227 = arith.addf %226, %225 : vector<8x32xf32>
    %228 = arith.divf %226, %227 : vector<8x32xf32>
    %229 = arith.mulf %220, %203 : vector<8x32xf32>
    %230 = arith.mulf %214, %222 : vector<8x32xf32>
    %231 = arith.addf %229, %230 : vector<8x32xf32>
    %232 = math.tanh %231 : vector<8x32xf32>
    %233 = arith.mulf %228, %232 : vector<8x32xf32>
    %234 = vector.extract_strided_slice %89 {offsets = [40, 0], sizes = [8, 128], strides = [1, 1]} : vector<64x128xf32> to vector<8x128xf32>
    %cst_110 = arith.constant dense<0.000000e+00> : vector<8x128xf32>
    %235 = tpu.matmul %233, %91, %cst_110 {dimension_numbers = #tpu.dot_dimension_numbers<[1], [0], [0], [1], [0, 0, 1, 1], [], []>} : vector<8x32xf32>, vector<32x128xf32>, vector<8x128xf32> -> vector<8x128xf32>
    %236 = arith.addf %234, %235 : vector<8x128xf32>
    %237 = vector.extract_strided_slice %236 {offsets = [0, 0], sizes = [8, 32], strides = [1, 1]} : vector<8x128xf32> to vector<8x32xf32>
    %238 = arith.negf %237 : vector<8x32xf32>
    %239 = math.exp %238 : vector<8x32xf32>
    %cst_111 = arith.constant 1.000000e+00 : f32
    %240 = vector.broadcast %cst_111 : f32 to vector<8x32xf32>
    %241 = arith.addf %240, %239 : vector<8x32xf32>
    %242 = arith.divf %240, %241 : vector<8x32xf32>
    %243 = vector.extract_strided_slice %236 {offsets = [0, 32], sizes = [8, 32], strides = [1, 1]} : vector<8x128xf32> to vector<8x32xf32>
    %244 = arith.negf %243 : vector<8x32xf32>
    %245 = math.exp %244 : vector<8x32xf32>
    %cst_112 = arith.constant 1.000000e+00 : f32
    %246 = vector.broadcast %cst_112 : f32 to vector<8x32xf32>
    %247 = arith.addf %246, %245 : vector<8x32xf32>
    %248 = arith.divf %246, %247 : vector<8x32xf32>
    %249 = vector.extract_strided_slice %236 {offsets = [0, 64], sizes = [8, 32], strides = [1, 1]} : vector<8x128xf32> to vector<8x32xf32>
    %250 = math.tanh %249 : vector<8x32xf32>
    %251 = vector.extract_strided_slice %236 {offsets = [0, 96], sizes = [8, 32], strides = [1, 1]} : vector<8x128xf32> to vector<8x32xf32>
    %252 = arith.negf %251 : vector<8x32xf32>
    %253 = math.exp %252 : vector<8x32xf32>
    %cst_113 = arith.constant 1.000000e+00 : f32
    %254 = vector.broadcast %cst_113 : f32 to vector<8x32xf32>
    %255 = arith.addf %254, %253 : vector<8x32xf32>
    %256 = arith.divf %254, %255 : vector<8x32xf32>
    %257 = arith.mulf %248, %231 : vector<8x32xf32>
    %258 = arith.mulf %242, %250 : vector<8x32xf32>
    %259 = arith.addf %257, %258 : vector<8x32xf32>
    %260 = math.tanh %259 : vector<8x32xf32>
    %261 = arith.mulf %256, %260 : vector<8x32xf32>
    %262 = vector.extract_strided_slice %89 {offsets = [48, 0], sizes = [8, 128], strides = [1, 1]} : vector<64x128xf32> to vector<8x128xf32>
    %cst_114 = arith.constant dense<0.000000e+00> : vector<8x128xf32>
    %263 = tpu.matmul %261, %91, %cst_114 {dimension_numbers = #tpu.dot_dimension_numbers<[1], [0], [0], [1], [0, 0, 1, 1], [], []>} : vector<8x32xf32>, vector<32x128xf32>, vector<8x128xf32> -> vector<8x128xf32>
    %264 = arith.addf %262, %263 : vector<8x128xf32>
    %265 = vector.extract_strided_slice %264 {offsets = [0, 0], sizes = [8, 32], strides = [1, 1]} : vector<8x128xf32> to vector<8x32xf32>
    %266 = arith.negf %265 : vector<8x32xf32>
    %267 = math.exp %266 : vector<8x32xf32>
    %cst_115 = arith.constant 1.000000e+00 : f32
    %268 = vector.broadcast %cst_115 : f32 to vector<8x32xf32>
    %269 = arith.addf %268, %267 : vector<8x32xf32>
    %270 = arith.divf %268, %269 : vector<8x32xf32>
    %271 = vector.extract_strided_slice %264 {offsets = [0, 32], sizes = [8, 32], strides = [1, 1]} : vector<8x128xf32> to vector<8x32xf32>
    %272 = arith.negf %271 : vector<8x32xf32>
    %273 = math.exp %272 : vector<8x32xf32>
    %cst_116 = arith.constant 1.000000e+00 : f32
    %274 = vector.broadcast %cst_116 : f32 to vector<8x32xf32>
    %275 = arith.addf %274, %273 : vector<8x32xf32>
    %276 = arith.divf %274, %275 : vector<8x32xf32>
    %277 = vector.extract_strided_slice %264 {offsets = [0, 64], sizes = [8, 32], strides = [1, 1]} : vector<8x128xf32> to vector<8x32xf32>
    %278 = math.tanh %277 : vector<8x32xf32>
    %279 = vector.extract_strided_slice %264 {offsets = [0, 96], sizes = [8, 32], strides = [1, 1]} : vector<8x128xf32> to vector<8x32xf32>
    %280 = arith.negf %279 : vector<8x32xf32>
    %281 = math.exp %280 : vector<8x32xf32>
    %cst_117 = arith.constant 1.000000e+00 : f32
    %282 = vector.broadcast %cst_117 : f32 to vector<8x32xf32>
    %283 = arith.addf %282, %281 : vector<8x32xf32>
    %284 = arith.divf %282, %283 : vector<8x32xf32>
    %285 = arith.mulf %276, %259 : vector<8x32xf32>
    %286 = arith.mulf %270, %278 : vector<8x32xf32>
    %287 = arith.addf %285, %286 : vector<8x32xf32>
    %288 = math.tanh %287 : vector<8x32xf32>
    %289 = arith.mulf %284, %288 : vector<8x32xf32>
    %290 = vector.extract_strided_slice %89 {offsets = [56, 0], sizes = [8, 128], strides = [1, 1]} : vector<64x128xf32> to vector<8x128xf32>
    %cst_118 = arith.constant dense<0.000000e+00> : vector<8x128xf32>
    %291 = tpu.matmul %289, %91, %cst_118 {dimension_numbers = #tpu.dot_dimension_numbers<[1], [0], [0], [1], [0, 0, 1, 1], [], []>} : vector<8x32xf32>, vector<32x128xf32>, vector<8x128xf32> -> vector<8x128xf32>
    %292 = arith.addf %290, %291 : vector<8x128xf32>
    %293 = vector.extract_strided_slice %292 {offsets = [0, 0], sizes = [8, 32], strides = [1, 1]} : vector<8x128xf32> to vector<8x32xf32>
    %294 = arith.negf %293 : vector<8x32xf32>
    %295 = math.exp %294 : vector<8x32xf32>
    %cst_119 = arith.constant 1.000000e+00 : f32
    %296 = vector.broadcast %cst_119 : f32 to vector<8x32xf32>
    %297 = arith.addf %296, %295 : vector<8x32xf32>
    %298 = arith.divf %296, %297 : vector<8x32xf32>
    %299 = vector.extract_strided_slice %292 {offsets = [0, 32], sizes = [8, 32], strides = [1, 1]} : vector<8x128xf32> to vector<8x32xf32>
    %300 = arith.negf %299 : vector<8x32xf32>
    %301 = math.exp %300 : vector<8x32xf32>
    %cst_120 = arith.constant 1.000000e+00 : f32
    %302 = vector.broadcast %cst_120 : f32 to vector<8x32xf32>
    %303 = arith.addf %302, %301 : vector<8x32xf32>
    %304 = arith.divf %302, %303 : vector<8x32xf32>
    %305 = vector.extract_strided_slice %292 {offsets = [0, 64], sizes = [8, 32], strides = [1, 1]} : vector<8x128xf32> to vector<8x32xf32>
    %306 = math.tanh %305 : vector<8x32xf32>
    %307 = vector.extract_strided_slice %292 {offsets = [0, 96], sizes = [8, 32], strides = [1, 1]} : vector<8x128xf32> to vector<8x32xf32>
    %308 = arith.negf %307 : vector<8x32xf32>
    %309 = math.exp %308 : vector<8x32xf32>
    %cst_121 = arith.constant 1.000000e+00 : f32
    %310 = vector.broadcast %cst_121 : f32 to vector<8x32xf32>
    %311 = arith.addf %310, %309 : vector<8x32xf32>
    %312 = arith.divf %310, %311 : vector<8x32xf32>
    %313 = arith.mulf %304, %287 : vector<8x32xf32>
    %314 = arith.mulf %298, %306 : vector<8x32xf32>
    %315 = arith.addf %313, %314 : vector<8x32xf32>
    %316 = math.tanh %315 : vector<8x32xf32>
    %317 = arith.mulf %312, %316 : vector<8x32xf32>
    %c0_122 = arith.constant 0 : index
    %c0_123 = arith.constant 0 : index
    %c0_124 = arith.constant 0 : index
    %318 = vector.load %arg6[%c0_122, %c0_123, %c0_124] : memref<1x32x2xf32, #tpu.memory_space<vmem>>, vector<1x32x2xf32>
    %319 = vector.shape_cast %318 : vector<1x32x2xf32> to vector<32x2xf32>
    %cst_125 = arith.constant dense<0.000000e+00> : vector<8x2xf32>
    %320 = tpu.matmul %317, %319, %cst_125 {dimension_numbers = #tpu.dot_dimension_numbers<[1], [0], [0], [1], [0, 0, 1, 1], [], []>} : vector<8x32xf32>, vector<32x2xf32>, vector<8x2xf32> -> vector<8x2xf32>
    %c0_126 = arith.constant 0 : index
    %c0_127 = arith.constant 0 : index
    %c0_128 = arith.constant 0 : index
    %321 = vector.load %arg7[%c0_126, %c0_127, %c0_128] : memref<1x1x2xf32, #tpu.memory_space<vmem>>, vector<1x1x2xf32>
    %322 = vector.shape_cast %321 : vector<1x1x2xf32> to vector<1x2xf32>
    %323 = vector.broadcast %322 : vector<1x2xf32> to vector<8x2xf32>
    %324 = arith.addf %320, %323 : vector<8x2xf32>
    %c0_129 = arith.constant 0 : index
    %c0_130 = arith.constant 0 : index
    %c0_131 = arith.constant 0 : index
    %325 = vector.load %arg8[%c0_129, %c0_130, %c0_131] : memref<1x8x2xf32, #tpu.memory_space<vmem>>, vector<1x8x2xf32>
    %326 = vector.shape_cast %325 : vector<1x8x2xf32> to vector<8x2xf32>
    %327 = vector.shape_cast %324 : vector<8x2xf32> to vector<1x8x2xf32>
    tpu.vector_store %arg8[%c0_129, %c0_130, %c0_131], %327 {strides = array<i32>} : memref<1x8x2xf32, #tpu.memory_space<vmem>>, vector<1x8x2xf32>,
    return
  }
  func.func @transform_0(%arg0: i32, %arg1: memref<2x8xi32, #tpu.memory_space<smem>>) -> (i32, i32, i32) {
    %c0_i32 = arith.constant 0 : i32
    %c0_i32_0 = arith.constant 0 : i32
    %c0_i32_1 = arith.constant 0 : i32
    return %arg0, %c0_i32, %c0_i32_0 : i32, i32, i32
  }
  func.func @transform_1(%arg0: i32, %arg1: memref<2x8xi32, #tpu.memory_space<smem>>) -> (i32, i32, i32) {
    %c0_i32 = arith.constant 0 : i32
    %c0_i32_0 = arith.constant 0 : i32
    %c0_i32_1 = arith.constant 0 : i32
    return %arg0, %c0_i32, %c0_i32_0 : i32, i32, i32
  }
  func.func @transform_2(%arg0: i32, %arg1: memref<2x8xi32, #tpu.memory_space<smem>>) -> (i32, i32, i32) {
    %c0_i32 = arith.constant 0 : i32
    %c0_i32_0 = arith.constant 0 : i32
    %c0_i32_1 = arith.constant 0 : i32
    return %arg0, %c0_i32, %c0_i32_0 : i32, i32, i32
  }
  func.func @transform_3(%arg0: i32, %arg1: memref<2x8xi32, #tpu.memory_space<smem>>) -> (i32, i32, i32) {
    %c0_i32 = arith.constant 0 : i32
    %c0_i32_0 = arith.constant 0 : i32
    %c0_i32_1 = arith.constant 0 : i32
    return %arg0, %c0_i32, %c0_i32_0 : i32, i32, i32
  }
  func.func @transform_4(%arg0: i32, %arg1: memref<2x8xi32, #tpu.memory_space<smem>>) -> (i32, i32, i32) {
    %c0_i32 = arith.constant 0 : i32
    %c0_i32_0 = arith.constant 0 : i32
    %c0_i32_1 = arith.constant 0 : i32
    return %arg0, %c0_i32, %c0_i32_0 : i32, i32, i32
  }
  func.func @transform_5(%arg0: i32, %arg1: memref<2x8xi32, #tpu.memory_space<smem>>) -> (i32, i32, i32) {
    %c0_i32 = arith.constant 0 : i32
    %c0_i32_0 = arith.constant 0 : i32
    %c0_i32_1 = arith.constant 0 : i32
    return %arg0, %c0_i32, %c0_i32_0 : i32, i32, i32
  }
  func.func @transform_6(%arg0: i32, %arg1: memref<2x8xi32, #tpu.memory_space<smem>>) -> (i32, i32, i32) {
    %c0_i32 = arith.constant 0 : i32
    %c0_i32_0 = arith.constant 0 : i32
    %c0_i32_1 = arith.constant 0 : i32
    return %arg0, %c0_i32, %c0_i32_0 : i32, i32, i32
  }
}

</mosaic_0001>

<llo_original>
// kernel: critic_forward_all.1
$region0: #{critic_forward_all.1}
  #allocation0 [shape = 'u32[]', space=smem, size = 0x4, offset = 0x4, fixed_abs, tag = 'smem constant byte address 0x4 - core index']
  #allocation1 [shape = 'u32[144,128]{1,0:T(1,128)}', space=vmem, size = 0x12000, scoped, tag = 'internal scratch']
  #allocation2 [shape = 'f32[64,32]{1,0:T(8,128)}', space=vmem, size = 0x8000, scoped, tag = 'scratch operand']
  #allocation3 [shape = 's32[1]{0}', space=sflag, size = 0x4, scoped, tag = 'scoped memory for critic_forward_all.1']
  #allocation4 [shape = 'u8[1024]{0}', space=smem, size = 0x400, scoped, tag = 'prefetched SMEM operand 0']
  %s0 = inlined_call_operand.vmem [shape: s32[2,8], index: 0, kind: input, shape index: {}]
  %s1 = inlined_call_operand.vmem [shape: f32[2,50,32], index: 1, kind: input, shape index: {}]
  %s2 = inlined_call_operand.vmem [shape: f32[2,32,128], index: 2, kind: input, shape index: {}]
  %s3 = inlined_call_operand.vmem [shape: f32[2,32,128], index: 3, kind: input, shape index: {}]
  %s4 = inlined_call_operand.vmem [shape: f32[2,1,128], index: 4, kind: input, shape index: {}]
  %s5 = inlined_call_operand.vmem [shape: f32[2,32,2], index: 5, kind: input, shape index: {}]
  %s6 = inlined_call_operand.vmem [shape: f32[2,1,2], index: 6, kind: input, shape index: {}]
  %s7 = inlined_call_operand.vmem [shape: f32[2,8,2], index: 7, kind: output, shape index: {}]
  %s8 = sld [smem:[#allocation0]]
  $region57: #{critic_forward_all.1} parent=0
    _
  %s10 = ssub.s32 1, %s8
  %s11 = scalar_select 0, %s10, %s8
  %s12 = sshll.u32 %s0, 4
  %s13 = int_to_ptr.vmem [resolvable:$true] %s12
  %15 = dma.vmem_to_smem %s13, 32, [#allocation4], [#allocation3]
  %16 = dma.done [#allocation3], 32
  %17 = sfence
  loop: start=0, step=1, limit=4
  $region2: #{critic_forward_all.1} parent=0 // loop_pre_header
    _
  $region3: #{critic_forward_all.1} parent=0 // loop_header
    %s19 = sphi 0, %s23
    %p20 = scmp.ge.s32.totalorder %s19, 4
    %s29 = sphi 0, %s31
    %s32 = sphi 0, %s29
    %s33 = sphi 0, %s32
    %s49 = sphi 0, %s33
    %s55 = sphi 0, %s57
    %s58 = sphi 0, %s55
    %s59 = sphi 0, %s58
    %s75 = sphi 0, %s59
    %s81 = sphi 0, %s83
    %s84 = sphi 0, %s81
    %s85 = sphi 0, %s84
    %s101 = sphi 0, %s85
    %s107 = sphi 0, %s109
    %s110 = sphi 0, %s107
    %s111 = sphi 0, %s110
    %s127 = sphi 0, %s111
    %s133 = sphi 0, %s135
    %s136 = sphi 0, %s133
    %s137 = sphi 0, %s136
    %s153 = sphi 0, %s137
    %s159 = sphi 0, %s161
    %s162 = sphi 0, %s159
    %s163 = sphi 0, %s162
    %s179 = sphi 0, %s163
    %s185 = sphi 0, %s187
    %s188 = sphi 0, %s185
    %s189 = sphi 0, %s188
    %s205 = sphi 0, %s189
  $region4: #{critic_forward_all.1} parent=0 // loop_header_branch
    %22 = sbr.rel (%p20) target = $region8
  $region5: #{critic_forward_all.1} parent=0 // loop_body
    %s24 = ssub.s32 %s19, 1
    %s25 = ssub.s32 %s19, 2
    %s26 = sadd.s32 %s19, 1
    %s27 = ssub.s32 %s19, %s26
    %p28 = scmp.eq.s32.totalorder %s27, 0
    %s30 = sadd.s32 %s29, 1
    %s31 = scalar_select %p28, %s29, %s30
    %p34 = pneg %p28
    %p35 = scmp.eq.s32.totalorder %s19, 1
    %p36 = por %p34, %p35
    %p37 = scmp.ne.s32.totalorder %s29, %s32
    %p38 = scmp.eq.s32.totalorder %s19, 0
    %p39 = por %p37, %p38
    %p40 = scmp.ne.s32.totalorder %s29, %s32
    %p41 = scmp.eq.s32.totalorder %s24, 1
    %p42 = por %p40, %p41
    %p43 = scmp.ne.s32.totalorder %s32, %s33
    %p44 = scmp.eq.s32.totalorder %s24, 0
    %p45 = por %p43, %p44
    %p46 = scmp.ne.s32.totalorder %s32, %s33
    %p47 = scmp.eq.s32.totalorder %s25, 1
    %p48 = por %p46, %p47
    %p50 = scmp.ne.s32.totalorder %s33, %s49
    %p51 = scmp.eq.s32.totalorder %s25, 0
    %p52 = por %p50, %p51
    %s53 = ssub.s32 %s19, %s26
    %p54 = scmp.eq.s32.totalorder %s53, 0
    %s56 = sadd.s32 %s55, 1
    %s57 = scalar_select %p54, %s55, %s56
    %p60 = pneg %p54
    %p61 = scmp.eq.s32.totalorder %s19, 1
    %p62 = por %p60, %p61
    %p63 = scmp.ne.s32.totalorder %s55, %s58
    %p64 = scmp.eq.s32.totalorder %s19, 0
    %p65 = por %p63, %p64
    %p66 = scmp.ne.s32.totalorder %s55, %s58
    %p67 = scmp.eq.s32.totalorder %s24, 1
    %p68 = por %p66, %p67
    %p69 = scmp.ne.s32.totalorder %s58, %s59
    %p70 = scmp.eq.s32.totalorder %s24, 0
    %p71 = por %p69, %p70
    %p72 = scmp.ne.s32.totalorder %s58, %s59
    %p73 = scmp.eq.s32.totalorder %s25, 1
    %p74 = por %p72, %p73
    %p76 = scmp.ne.s32.totalorder %s59, %s75
    %p77 = scmp.eq.s32.totalorder %s25, 0
    %p78 = por %p76, %p77
    %s79 = ssub.s32 %s19, %s26
    %p80 = scmp.eq.s32.totalorder %s79, 0
    %s82 = sadd.s32 %s81, 1
    %s83 = scalar_select %p80, %s81, %s82
    %p86 = pneg %p80
    %p87 = scmp.eq.s32.totalorder %s19, 1
    %p88 = por %p86, %p87
    %p89 = scmp.ne.s32.totalorder %s81, %s84
    %p90 = scmp.eq.s32.totalorder %s19, 0
    %p91 = por %p89, %p90
    %p92 = scmp.ne.s32.totalorder %s81, %s84
    %p93 = scmp.eq.s32.totalorder %s24, 1
    %p94 = por %p92, %p93
    %p95 = scmp.ne.s32.totalorder %s84, %s85
    %p96 = scmp.eq.s32.totalorder %s24, 0
    %p97 = por %p95, %p96
    %p98 = scmp.ne.s32.totalorder %s84, %s85
    %p99 = scmp.eq.s32.totalorder %s25, 1
    %p100 = por %p98, %p99
    %p102 = scmp.ne.s32.totalorder %s85, %s101
    %p103 = scmp.eq.s32.totalorder %s25, 0
    %p104 = por %p102, %p103
    %s105 = ssub.s32 %s19, %s26
    %p106 = scmp.eq.s32.totalorder %s105, 0
    %s108 = sadd.s32 %s107, 1
    %s109 = scalar_select %p106, %s107, %s108
    %p112 = pneg %p106
    %p113 = scmp.eq.s32.totalorder %s19, 1
    %p114 = por %p112, %p113
    %p115 = scmp.ne.s32.totalorder %s107, %s110
    %p116 = scmp.eq.s32.totalorder %s19, 0
    %p117 = por %p115, %p116
    %p118 = scmp.ne.s32.totalorder %s107, %s110
    %p119 = scmp.eq.s32.totalorder %s24, 1
    %p120 = por %p118, %p119
    %p121 = scmp.ne.s32.totalorder %s110, %s111
    %p122 = scmp.eq.s32.totalorder %s24, 0
    %p123 = por %p121, %p122
    %p124 = scmp.ne.s32.totalorder %s110, %s111
    %p125 = scmp.eq.s32.totalorder %s25, 1
    %p126 = por %p124, %p125
    %p128 = scmp.ne.s32.totalorder %s111, %s127
    %p129 = scmp.eq.s32.totalorder %s25, 0
    %p130 = por %p128, %p129
    %s131 = ssub.s32 %s19, %s26
    %p132 = scmp.eq.s32.totalorder %s131, 0
    %s134 = sadd.s32 %s133, 1
    %s135 = scalar_select %p132, %s133, %s134
    %p138 = pneg %p132
    %p139 = scmp.eq.s32.totalorder %s19, 1
    %p140 = por %p138, %p139
    %p141 = scmp.ne.s32.totalorder %s133, %s136
    %p142 = scmp.eq.s32.totalorder %s19, 0
    %p143 = por %p141, %p142
    %p144 = scmp.ne.s32.totalorder %s133, %s136
    %p145 = scmp.eq.s32.totalorder %s24, 1
    %p146 = por %p144, %p145
    %p147 = scmp.ne.s32.totalorder %s136, %s137
    %p148 = scmp.eq.s32.totalorder %s24, 0
    %p149 = por %p147, %p148
    %p150 = scmp.ne.s32.totalorder %s136, %s137
    %p151 = scmp.eq.s32.totalorder %s25, 1
    %p152 = por %p150, %p151
    %p154 = scmp.ne.s32.totalorder %s137, %s153
    %p155 = scmp.eq.s32.totalorder %s25, 0
    %p156 = por %p154, %p155
    %s157 = ssub.s32 %s19, %s26
    %p158 = scmp.eq.s32.totalorder %s157, 0
    %s160 = sadd.s32 %s159, 1
    %s161 = scalar_select %p158, %s159, %s160
    %p164 = pneg %p158
    %p165 = scmp.eq.s32.totalorder %s19, 1
    %p166 = por %p164, %p165
    %p167 = scmp.ne.s32.totalorder %s159, %s162
    %p168 = scmp.eq.s32.totalorder %s19, 0
    %p169 = por %p167, %p168
    %p170 = scmp.ne.s32.totalorder %s159, %s162
    %p171 = scmp.eq.s32.totalorder %s24, 1
    %p172 = por %p170, %p171
    %p173 = scmp.ne.s32.totalorder %s162, %s163
    %p174 = scmp.eq.s32.totalorder %s24, 0
    %p175 = por %p173, %p174
    %p176 = scmp.ne.s32.totalorder %s162, %s163
    %p177 = scmp.eq.s32.totalorder %s25, 1
    %p178 = por %p176, %p177
    %p180 = scmp.ne.s32.totalorder %s163, %s179
    %p181 = scmp.eq.s32.totalorder %s25, 0
    %p182 = por %p180, %p181
    %s183 = ssub.s32 %s19, %s26
    %p184 = scmp.eq.s32.totalorder %s183, 0
    %s186 = sadd.s32 %s185, 1
    %s187 = scalar_select %p184, %s185, %s186
    %p190 = pneg %p184
    %p191 = scmp.eq.s32.totalorder %s19, 1
    %p192 = por %p190, %p191
    %p193 = scmp.ne.s32.totalorder %s185, %s188
    %p194 = scmp.eq.s32.totalorder %s19, 0
    %p195 = por %p193, %p194
    %p196 = scmp.ne.s32.totalorder %s185, %s188
    %p197 = scmp.eq.s32.totalorder %s24, 1
    %p198 = por %p196, %p197
    %p199 = scmp.ne.s32.totalorder %s188, %s189
    %p200 = scmp.eq.s32.totalorder %s24, 0
    %p201 = por %p199, %p200
    %p202 = scmp.ne.s32.totalorder %s188, %s189
    %p203 = scmp.eq.s32.totalorder %s25, 1
    %p204 = por %p202, %p203
    %p206 = scmp.ne.s32.totalorder %s189, %s205
    %p207 = scmp.eq.s32.totalorder %s25, 0
    %p208 = por %p206, %p207
    %p209 = scmp.le.s32.totalorder 1, %s19
    %p210 = scmp.lt.s32.totalorder %s19, 3
    %p211 = pnand %p209, %p210
    %p212 = pneg %p211
    // Predicated region
    $region9: #{critic_forward_all.1} parent=5 // pred_check
      _
    $region10: #{critic_forward_all.1} parent=5 // pred_check_branch
      %214 = sbr.rel (%p211) target = $region12
    $region11: #{critic_forward_all.1} parent=5 // pred_region
      %s215 = ssub.s32 %s19, 1
    $region12: #{critic_forward_all.1} parent=5 // pred_fallthru
      _
    %p216 = scmp.lt.s32.totalorder %s19, 2
    // Predicated region
    $region13: #{critic_forward_all.1} parent=5 // pred_check
      %p217 = pneg %p216
    $region14: #{critic_forward_all.1} parent=5 // pred_check_branch
      %219 = sbr.rel (%p217) target = $region16
    $region15: #{critic_forward_all.1} parent=5 // pred_region
      // Predicated region
      $region17: #{critic_forward_all.1} parent=15 // pred_check
        %p220 = pneg %p39
      $region18: #{critic_forward_all.1} parent=15 // pred_check_branch
        %222 = sbr.rel (%p220) target = $region20
      $region19: #{critic_forward_all.1} parent=15 // pred_region
        %p223 = scmp.lt.s32.totalorder %s19, 1
        %s224 = scalar_select %p223, %s19, 1
        %s225 = smul.addr %s224, 7
        %s226 = smul.addr %s225, 8
        %s227 = scalar_lea.vmem %s1, %s226
      $region20: #{critic_forward_all.1} parent=15 // pred_fallthru
        _
      // Predicated region
      $region21: #{critic_forward_all.1} parent=15 // pred_check
        %p228 = pneg %p65
      $region22: #{critic_forward_all.1} parent=15 // pred_check_branch
        %230 = sbr.rel (%p228) target = $region24
      $region23: #{critic_forward_all.1} parent=15 // pred_region
        %p231 = scmp.lt.s32.totalorder %s19, 1
        %s232 = scalar_select %p231, %s19, 1
        %s233 = smul.addr %s232, 4
        %s234 = smul.addr %s233, 8
        %s235 = scalar_lea.vmem %s2, %s234
      $region24: #{critic_forward_all.1} parent=15 // pred_fallthru
        _
      // Predicated region
      $region25: #{critic_forward_all.1} parent=15 // pred_check
        %p236 = pneg %p91
      $region26: #{critic_forward_all.1} parent=15 // pred_check_branch
        %238 = sbr.rel (%p236) target = $region28
      $region27: #{critic_forward_all.1} parent=15 // pred_region
        %p239 = scmp.lt.s32.totalorder %s19, 1
        %s240 = scalar_select %p239, %s19, 1
        %s241 = smul.addr %s240, 4
        %s242 = smul.addr %s241, 8
        %s243 = scalar_lea.vmem %s3, %s242
      $region28: #{critic_forward_all.1} parent=15 // pred_fallthru
        _
      // Predicated region
      $region29: #{critic_forward_all.1} parent=15 // pred_check
        %p244 = pneg %p117
      $region30: #{critic_forward_all.1} parent=15 // pred_check_branch
        %246 = sbr.rel (%p244) target = $region32
      $region31: #{critic_forward_all.1} parent=15 // pred_region
        %p247 = scmp.lt.s32.totalorder %s19, 1
        %s248 = scalar_select %p247, %s19, 1
        %s249 = scalar_lea.vmem %s4, %s248
      $region32: #{critic_forward_all.1} parent=15 // pred_fallthru
        _
      // Predicated region
      $region33: #{critic_forward_all.1} parent=15 // pred_check
        %p250 = pneg %p143
      $region34: #{critic_forward_all.1} parent=15 // pred_check_branch
        %252 = sbr.rel (%p250) target = $region36
      $region35: #{critic_forward_all.1} parent=15 // pred_region
        %p253 = scmp.lt.s32.totalorder %s19, 1
        %s254 = scalar_select %p253, %s19, 1
        %s255 = smul.addr %s254, 4
        %s256 = smul.addr %s255, 8
        %s257 = scalar_lea.vmem %s5, %s256
      $region36: #{critic_forward_all.1} parent=15 // pred_fallthru
        _
      // Predicated region
      $region37: #{critic_forward_all.1} parent=15 // pred_check
        %p258 = pneg %p169
      $region38: #{critic_forward_all.1} parent=15 // pred_check_branch
        %260 = sbr.rel (%p258) target = $region40
      $region39: #{critic_forward_all.1} parent=15 // pred_region
        %p261 = scmp.lt.s32.totalorder %s19, 1
        %s262 = scalar_select %p261, %s19, 1
        %s263 = scalar_lea.vmem %s6, %s262
      $region40: #{critic_forward_all.1} parent=15 // pred_fallthru
        _
    $region16: #{critic_forward_all.1} parent=5 // pred_fallthru
      _
    %p264 = scmp.le.s32.totalorder 1, %s19
    %p265 = scmp.lt.s32.totalorder %s19, 3
    %p266 = pnand %p264, %p265
    %p267 = pneg %p266
    // Predicated region
    $region41: #{critic_forward_all.1} parent=5 // pred_check
      _
    $region42: #{critic_forward_all.1} parent=5 // pred_check_branch
      %269 = sbr.rel (%p266) target = $region44
    $region43: #{critic_forward_all.1} parent=5 // pred_region
      %s270 = ssub.s32 %s19, 1
      %p271 = scmp.lt.s32.totalorder %s24, 1
      %s272 = scalar_select %p271, %s24, 1
      %s273 = smul.addr %s272, 7
      %s274 = smul.addr %s273, 8
      %s275 = scalar_lea.vmem %s1, %s274
      %p276 = pneg %p45
      %p277 = pneg %p42
      %p278 = scmp.lt.s32.totalorder %s24, 1
      %s279 = scalar_select %p278, %s24, 1
      %s280 = smul.addr %s279, 4
      %s281 = smul.addr %s280, 8
      %s282 = scalar_lea.vmem %s2, %s281
      %p283 = pneg %p71
      %p284 = pneg %p68
      %p285 = scmp.lt.s32.totalorder %s24, 1
      %s286 = scalar_select %p285, %s24, 1
      %s287 = smul.addr %s286, 4
      %s288 = smul.addr %s287, 8
      %s289 = scalar_lea.vmem %s3, %s288
      %p290 = pneg %p97
      %p291 = pneg %p94
      %p292 = scmp.lt.s32.totalorder %s24, 1
      %s293 = scalar_select %p292, %s24, 1
      %s294 = scalar_lea.vmem %s4, %s293
      %p295 = pneg %p123
      %p296 = pneg %p120
      %p297 = scmp.lt.s32.totalorder %s24, 1
      %s298 = scalar_select %p297, %s24, 1
      %s299 = smul.addr %s298, 4
      %s300 = smul.addr %s299, 8
      %s301 = scalar_lea.vmem %s5, %s300
      %p302 = pneg %p149
      %p303 = pneg %p146
      %p304 = scmp.lt.s32.totalorder %s24, 1
      %s305 = scalar_select %p304, %s24, 1
      %s306 = scalar_lea.vmem %s6, %s305
      %p307 = pneg %p175
      %p308 = pneg %p172
      %p309 = pneg %p201
      %p310 = pneg %p198
      %p311 = scmp.lt.s32.totalorder %s24, 1
      %s312 = scalar_select %p311, %s24, 1
      %s313 = smul.addr %s312, 8
      %s314 = scalar_lea.vmem %s7, %s313
      %p315 = scmp.lt.s32.totalorder %s24, 1
      %s316 = scalar_select %p315, %s24, 1
      %s317 = smul.addr %s316, 7
      %s318 = smul.addr %s317, 8
      %s319 = scalar_lea.vmem %s1, %s318
      %p320 = scmp.lt.s32.totalorder %s24, 1
      %s321 = scalar_select %p320, %s24, 1
      %s322 = smul.addr %s321, 4
      %s323 = smul.addr %s322, 8
      %s324 = scalar_lea.vmem %s2, %s323
      %p325 = scmp.lt.s32.totalorder %s24, 1
      %s326 = scalar_select %p325, %s24, 1
      %s327 = smul.addr %s326, 4
      %s328 = smul.addr %s327, 8
      %s329 = scalar_lea.vmem %s3, %s328
      %p330 = scmp.lt.s32.totalorder %s24, 1
      %s331 = scalar_select %p330, %s24, 1
      %s332 = scalar_lea.vmem %s4, %s331
      %p333 = scmp.lt.s32.totalorder %s24, 1
      %s334 = scalar_select %p333, %s24, 1
      %s335 = smul.addr %s334, 4
      %s336 = smul.addr %s335, 8
      %s337 = scalar_lea.vmem %s5, %s336
      %p338 = scmp.lt.s32.totalorder %s24, 1
      %s339 = scalar_select %p338, %s24, 1
      %s340 = scalar_lea.vmem %s6, %s339
      %p341 = scmp.lt.s32.totalorder %s24, 1
      %s342 = scalar_select %p341, %s24, 1
      %s343 = smul.addr %s342, 8
      %s344 = scalar_lea.vmem %s7, %s343
      %vm345 = vcmask 261120
      %346 = vst.msk [vmem:[#allocation2] sm:$0xff] %vm345, 0.0
      %347 = vst.msk [vmem:[#allocation2 + $0x8] sm:$0xff] %vm345, 0.0
      %348 = vst.msk [vmem:[#allocation2 + $0x10] sm:$0xff] %vm345, 0.0
      %349 = vst.msk [vmem:[#allocation2 + $0x18] sm:$0xff] %vm345, 0.0
      %350 = vst.msk [vmem:[#allocation2 + $0x20] sm:$0xff] %vm345, 0.0
      %351 = vst.msk [vmem:[#allocation2 + $0x28] sm:$0xff] %vm345, 0.0
      %352 = vst.msk [vmem:[#allocation2 + $0x30] sm:$0xff] %vm345, 0.0
      %353 = vst.msk [vmem:[#allocation2 + $0x38] sm:$0xff] %vm345, 0.0
      %s354 = sld [smem:[#allocation4]]
      %s355 = scalar_lea.vmem %s319, %s354
      %v356 = vld [vmem:[%s355] sm:$0x1]
      %vm357 = vcmask 253952
      %358 = vst.msk [vmem:[#allocation2] sm:$0x1] %vm357, %v356
      %s359 = sld [smem:[#allocation4 + $0x80]]
      %s360 = scalar_lea.vmem %s319, %s359
      %v361 = vld [vmem:[%s360] sm:$0x1]
      %362 = vst.msk [vmem:[#allocation2 + $0x1] sm:$0x1] %vm357, %v361
      %s363 = sld [smem:[#allocation4 + $0x1]]
      %s364 = scalar_lea.vmem %s319, %s363
      %v365 = vld [vmem:[%s364] sm:$0x1]
      %366 = vst.msk [vmem:[#allocation2 + $0x8] sm:$0x1] %vm357, %v365
      %s367 = sld [smem:[#allocation4 + $0x81]]
      %s368 = scalar_lea.vmem %s319, %s367
      %v369 = vld [vmem:[%s368] sm:$0x1]
      %370 = vst.msk [vmem:[#allocation2 + $0x9] sm:$0x1] %vm357, %v369
      %s371 = sld [smem:[#allocation4 + $0x2]]
      %s372 = scalar_lea.vmem %s319, %s371
      %v373 = vld [vmem:[%s372] sm:$0x1]
      %374 = vst.msk [vmem:[#allocation2 + $0x10] sm:$0x1] %vm357, %v373
      %s375 = sld [smem:[#allocation4 + $0x82]]
      %s376 = scalar_lea.vmem %s319, %s375
      %v377 = vld [vmem:[%s376] sm:$0x1]
      %378 = vst.msk [vmem:[#allocation2 + $0x11] sm:$0x1] %vm357, %v377
      %s379 = sld [smem:[#allocation4 + $0x3]]
      %s380 = scalar_lea.vmem %s319, %s379
      %v381 = vld [vmem:[%s380] sm:$0x1]
      %382 = vst.msk [vmem:[#allocation2 + $0x18] sm:$0x1] %vm357, %v381
      %s383 = sld [smem:[#allocation4 + $0x83]]
      %s384 = scalar_lea.vmem %s319, %s383
      %v385 = vld [vmem:[%s384] sm:$0x1]
      %386 = vst.msk [vmem:[#allocation2 + $0x19] sm:$0x1] %vm357, %v385
      %s387 = sld [smem:[#allocation4 + $0x4]]
      %s388 = scalar_lea.vmem %s319, %s387
      %v389 = vld [vmem:[%s388] sm:$0x1]
      %390 = vst.msk [vmem:[#allocation2 + $0x20] sm:$0x1] %vm357, %v389
      %s391 = sld [smem:[#allocation4 + $0x84]]
      %s392 = scalar_lea.vmem %s319, %s391
      %v393 = vld [vmem:[%s392] sm:$0x1]
      %394 = vst.msk [vmem:[#allocation2 + $0x21] sm:$0x1] %vm357, %v393
      %s395 = sld [smem:[#allocation4 + $0x5]]
      %s396 = scalar_lea.vmem %s319, %s395
      %v397 = vld [vmem:[%s396] sm:$0x1]
      %398 = vst.msk [vmem:[#allocation2 + $0x28] sm:$0x1] %vm357, %v397
      %s399 = sld [smem:[#allocation4 + $0x85]]
      %s400 = scalar_lea.vmem %s319, %s399
      %v401 = vld [vmem:[%s400] sm:$0x1]
      %402 = vst.msk [vmem:[#allocation2 + $0x29] sm:$0x1] %vm357, %v401
      %s403 = sld [smem:[#allocation4 + $0x6]]
      %s404 = scalar_lea.vmem %s319, %s403
      %v405 = vld [vmem:[%s404] sm:$0x1]
      %406 = vst.msk [vmem:[#allocation2 + $0x30] sm:$0x1] %vm357, %v405
      %s407 = sld [smem:[#allocation4 + $0x86]]
      %s408 = scalar_lea.vmem %s319, %s407
      %v409 = vld [vmem:[%s408] sm:$0x1]
      %410 = vst.msk [vmem:[#allocation2 + $0x31] sm:$0x1] %vm357, %v409
      %s411 = sld [smem:[#allocation4 + $0x7]]
      %s412 = scalar_lea.vmem %s319, %s411
      %v413 = vld [vmem:[%s412] sm:$0x1]
      %414 = vst.msk [vmem:[#allocation2 + $0x38] sm:$0x1] %vm357, %v413
      %s415 = sld [smem:[#allocation4 + $0x87]]
      %s416 = scalar_lea.vmem %s319, %s415
      %v417 = vld [vmem:[%s416] sm:$0x1]
      %418 = vst.msk [vmem:[#allocation2 + $0x39] sm:$0x1] %vm357, %v417
      %v419 = vld [vmem:[#allocation2] sm:$0xff]
      %v420 = vld [vmem:[#allocation2 + $0x8] sm:$0xff]
      %v421 = vld [vmem:[#allocation2 + $0x10] sm:$0xff]
      %v422 = vld [vmem:[#allocation2 + $0x18] sm:$0xff]
      %v423 = vld [vmem:[#allocation2 + $0x20] sm:$0xff]
      %v424 = vld [vmem:[#allocation2 + $0x28] sm:$0xff]
      %v425 = vld [vmem:[#allocation2 + $0x30] sm:$0xff]
      %v426 = vld [vmem:[#allocation2 + $0x38] sm:$0xff]
      %v427 = vld [vmem:[%s324] sm:$0xff]
      %v428 = vld [vmem:[%s324 + $0x8] sm:$0xff]
      %v429 = vld [vmem:[%s324 + $0x10] sm:$0xff]
      %v430 = vld [vmem:[%s324 + $0x18] sm:$0xff]
      %v431 = vld [vmem:[%s332] sm:$0x1]
      %v433 = vlaneseq
      %v434 = vshrl.u32 %v433, 7
      %v435 = vsub.s32 0, %v434
      %v436 = vrot.slane %v431, %v435
      %v439 = vsel %vm345, %v419, 0
      %v442 = vsel %vm345, %v420, 0
      %v445 = vsel %vm345, %v421, 0
      %v448 = vsel %vm345, %v422, 0
      %v451 = vsel %vm345, %v423, 0
      %v454 = vsel %vm345, %v424, 0
      %v457 = vsel %vm345, %v425, 0
      %v460 = vsel %vm345, %v426, 0
      %462 = vmatprep.subr.mxu0 0.0
      %463 = vmatpush1.msra.mxu0 0.0
      %464 = vmatprep.subr.mxu0 0.0
      %465 = vmatpush1.msra.mxu0 0.0
      %466 = vmatprep.subr.mxu0 0.0
      %467 = vmatpush1.msra.mxu0 0.0
      %468 = vmatprep.subr.mxu0 0.0
      %469 = vmatpush1.msra.mxu0 0.0
      %470 = vmatprep.subr.mxu0 0.0
      %471 = vmatpush1.msra.mxu0 0.0
      %472 = vmatprep.subr.mxu0 0.0
      %473 = vmatpush1.msra.mxu0 0.0
      %474 = vmatprep.subr.mxu0 0.0
      %475 = vmatpush1.msra.mxu0 0.0
      %476 = vmatprep.subr.mxu0 0.0
      %477 = vmatpush1.msra.mxu0 0.0
      %478 = vmatprep.subr.mxu0 0.0
      %479 = vmatpush1.msra.mxu0 0.0
      %480 = vmatprep.subr.mxu0 0.0
      %481 = vmatpush1.msra.mxu0 0.0
      %482 = vmatprep.subr.mxu0 0.0
      %483 = vmatpush1.msra.mxu0 0.0
      %484 = vmatprep.subr.mxu0 0.0
      %485 = vmatpush1.msra.mxu0 0.0
      %486 = vmatprep.subr.mxu0 0.0
      %487 = vmatpush1.msra.mxu0 %v430
      %488 = vmatprep.subr.mxu0 0.0
      %489 = vmatpush1.msra.mxu0 %v429
      %490 = vmatprep.subr.mxu0 0.0
      %491 = vmatpush1.msra.mxu0 %v428
      %492 = vmatprep.subr.mxu0 0.0
      %493 = vmatpush1.msra.mxu0 %v427
      %494 = vmatprep.subr.mxu0 0.0
      %495 = vmatpush2.msra.mxu0 0.0
      %496 = vmatprep.subr.mxu0 0.0
      %497 = vmatpush2.msra.mxu0 0.0
      %498 = vmatprep.subr.mxu0 0.0
      %499 = vmatpush2.msra.mxu0 0.0
      %500 = vmatprep.subr.mxu0 0.0
      %501 = vmatpush2.msra.mxu0 0.0
      %502 = vmatprep.subr.mxu0 0.0
      %503 = vmatpush2.msra.mxu0 0.0
      %504 = vmatprep.subr.mxu0 0.0
      %505 = vmatpush2.msra.mxu0 0.0
      %506 = vmatprep.subr.mxu0 0.0
      %507 = vmatpush2.msra.mxu0 0.0
      %508 = vmatprep.subr.mxu0 0.0
      %509 = vmatpush2.msra.mxu0 0.0
      %510 = vmatprep.subr.mxu0 0.0
      %511 = vmatpush2.msra.mxu0 0.0
      %512 = vmatprep.subr.mxu0 0.0
      %513 = vmatpush2.msra.mxu0 0.0
      %514 = vmatprep.subr.mxu0 0.0
      %515 = vmatpush2.msra.mxu0 0.0
      %516 = vmatprep.subr.mxu0 0.0
      %517 = vmatpush2.msra.mxu0 0.0
      %518 = vmatprep.subr.mxu0 0.0
      %519 = vmatpush2.msra.mxu0 0.0
      %520 = vmatprep.subr.mxu0 0.0
      %521 = vmatpush2.msra.mxu0 0.0
      %522 = vmatprep.subr.mxu0 0.0
      %523 = vmatpush2.msra.mxu0 0.0
      %524 = vmatprep.subr.mxu0 0.0
      %525 = vmatpush2.msra.mxu0 0.0
      %526 = vmatprep.mubr.f32.mxu0 0.0
      %527 = vmatmul.mubr.f32.gmra.mxu0 %v439
      %v528 = vpop.f32.mrf.mxu0
      %v529 = vadd.f32 %v436, %v528
      %v530 = vpop.f32.mrf.mxu0
      %531 = vmatprep.mubr.f32.mxu0 0.0
      %532 = vmatmul.mubr.f32.gmra.mxu0 %v442
      %v533 = vpop.f32.mrf.mxu0
      %v534 = vadd.f32 %v436, %v533
      %v535 = vpop.f32.mrf.mxu0
      %536 = vmatprep.mubr.f32.mxu0 0.0
      %537 = vmatmul.mubr.f32.gmra.mxu0 %v445
      %v538 = vpop.f32.mrf.mxu0
      %v539 = vadd.f32 %v436, %v538
      %v540 = vpop.f32.mrf.mxu0
      %541 = vmatprep.mubr.f32.mxu0 0.0
      %542 = vmatmul.mubr.f32.gmra.mxu0 %v448
      %v543 = vpop.f32.mrf.mxu0
      %v544 = vadd.f32 %v436, %v543
      %v545 = vpop.f32.mrf.mxu0
      %546 = vmatprep.mubr.f32.mxu0 0.0
      %547 = vmatmul.mubr.f32.gmra.mxu0 %v451
      %v548 = vpop.f32.mrf.mxu0
      %v549 = vadd.f32 %v436, %v548
      %v550 = vpop.f32.mrf.mxu0
      %551 = vmatprep.mubr.f32.mxu0 0.0
      %552 = vmatmul.mubr.f32.gmra.mxu0 %v454
      %v553 = vpop.f32.mrf.mxu0
      %v554 = vadd.f32 %v436, %v553
      %v555 = vpop.f32.mrf.mxu0
      %556 = vmatprep.mubr.f32.mxu0 0.0
      %557 = vmatmul.mubr.f32.gmra.mxu0 %v457
      %v558 = vpop.f32.mrf.mxu0
      %v559 = vadd.f32 %v436, %v558
      %v560 = vpop.f32.mrf.mxu0
      %561 = vmatprep.mubr.f32.mxu0 0.0
      %562 = vmatmul.mubr.f32.gmra.mxu0 %v460
      %v563 = vpop.f32.mrf.mxu0
      %v564 = vadd.f32 %v436, %v563
      %v565 = vpop.f32.mrf.mxu0
      %566 = vdwg.mxu0
      %v567 = vld [vmem:[%s329] sm:$0xff]
      %v568 = vld [vmem:[%s329 + $0x8] sm:$0xff]
      %v569 = vld [vmem:[%s329 + $0x10] sm:$0xff]
      %v570 = vld [vmem:[%s329 + $0x18] sm:$0xff]
      %v572 = vsel %vm345, 0.0, 0
      %574 = vmatprep.subr.mxu0 0.0
      %575 = vmatpush1.msra.mxu0 0.0
      %576 = vmatprep.subr.mxu0 0.0
      %577 = vmatpush1.msra.mxu0 0.0
      %578 = vmatprep.subr.mxu0 0.0
      %579 = vmatpush1.msra.mxu0 0.0
      %580 = vmatprep.subr.mxu0 0.0
      %581 = vmatpush1.msra.mxu0 0.0
      %582 = vmatprep.subr.mxu0 0.0
      %583 = vmatpush1.msra.mxu0 0.0
      %584 = vmatprep.subr.mxu0 0.0
      %585 = vmatpush1.msra.mxu0 0.0
      %586 = vmatprep.subr.mxu0 0.0
      %587 = vmatpush1.msra.mxu0 0.0
      %588 = vmatprep.subr.mxu0 0.0
      %589 = vmatpush1.msra.mxu0 0.0
      %590 = vmatprep.subr.mxu0 0.0
      %591 = vmatpush1.msra.mxu0 0.0
      %592 = vmatprep.subr.mxu0 0.0
      %593 = vmatpush1.msra.mxu0 0.0
      %594 = vmatprep.subr.mxu0 0.0
      %595 = vmatpush1.msra.mxu0 0.0
      %596 = vmatprep.subr.mxu0 0.0
      %597 = vmatpush1.msra.mxu0 0.0
      %598 = vmatprep.subr.mxu0 0.0
      %599 = vmatpush1.msra.mxu0 %v570
      %600 = vmatprep.subr.mxu0 0.0
      %601 = vmatpush1.msra.mxu0 %v569
      %602 = vmatprep.subr.mxu0 0.0
      %603 = vmatpush1.msra.mxu0 %v568
      %604 = vmatprep.subr.mxu0 0.0
      %605 = vmatpush1.msra.mxu0 %v567
      %606 = vmatprep.subr.mxu0 0.0
      %607 = vmatpush2.msra.mxu0 0.0
      %608 = vmatprep.subr.mxu0 0.0
      %609 = vmatpush2.msra.mxu0 0.0
      %610 = vmatprep.subr.mxu0 0.0
      %611 = vmatpush2.msra.mxu0 0.0
      %612 = vmatprep.subr.mxu0 0.0
      %613 = vmatpush2.msra.mxu0 0.0
      %614 = vmatprep.subr.mxu0 0.0
      %615 = vmatpush2.msra.mxu0 0.0
      %616 = vmatprep.subr.mxu0 0.0
      %617 = vmatpush2.msra.mxu0 0.0
      %618 = vmatprep.subr.mxu0 0.0
      %619 = vmatpush2.msra.mxu0 0.0
      %620 = vmatprep.subr.mxu0 0.0
      %621 = vmatpush2.msra.mxu0 0.0
      %622 = vmatprep.subr.mxu0 0.0
      %623 = vmatpush2.msra.mxu0 0.0
      %624 = vmatprep.subr.mxu0 0.0
      %625 = vmatpush2.msra.mxu0 0.0
      %626 = vmatprep.subr.mxu0 0.0
      %627 = vmatpush2.msra.mxu0 0.0
      %628 = vmatprep.subr.mxu0 0.0
      %629 = vmatpush2.msra.mxu0 0.0
      %630 = vmatprep.subr.mxu0 0.0
      %631 = vmatpush2.msra.mxu0 0.0
      %632 = vmatprep.subr.mxu0 0.0
      %633 = vmatpush2.msra.mxu0 0.0
      %634 = vmatprep.subr.mxu0 0.0
      %635 = vmatpush2.msra.mxu0 0.0
      %636 = vmatprep.subr.mxu0 0.0
      %637 = vmatpush2.msra.mxu0 0.0
      %638 = vmatprep.mubr.f32.mxu0 0.0
      %639 = vmatmul.mubr.f32.gmra.mxu0 %v572
      %v640 = vpop.f32.mrf.mxu0
      %v641 = vadd.f32 0.0, %v640
      %v642 = vpop.f32.mrf.mxu0
      %643 = vdwg.mxu0
      %v644 = vadd.f32 %v529, %v641
      %v645 = vxor.u32 %v644, 2147483648
      %v646 = vmul.f32 %v645, 1.442695
      %v647 = vpow.pop %v646
      %v648 = vadd.f32 %v647, 1.0
      %v649 = vrcp.pop %v648
      %v650 = vmul.f32 1.0, %v649
      %v651 = vtanh.pop %v644
      %v652 = vmul.f32 %v650, 0.0
      %654 = vrot.lane.b32.xlu0 %v651, 64
      %v655 = vpop.permute.xlu0 %654
      %v657 = vmul.f32 %v650, %v655
      %659 = vrot.lane.b32.xlu0 %v657, 32
      %v660 = vpop.permute.xlu0 %659
      %v662 = vadd.f32 %v652, %v660
      %v663 = vtanh.pop %v662
      %665 = vrot.lane.b32.xlu0 %v663, 64
      %v666 = vpop.permute.xlu0 %665
      %v668 = vmul.f32 %v650, %v666
      %670 = vrot.lane.b32.xlu0 %v668, 32
      %v671 = vpop.permute.xlu0 %670
      %v672 = vsel %vm345, %v671, 0
      %674 = vmatprep.subr.mxu0 0.0
      %675 = vmatpush1.msra.mxu0 0.0
      %676 = vmatprep.subr.mxu0 0.0
      %677 = vmatpush1.msra.mxu0 0.0
      %678 = vmatprep.subr.mxu0 0.0
      %679 = vmatpush1.msra.mxu0 0.0
      %680 = vmatprep.subr.mxu0 0.0
      %681 = vmatpush1.msra.mxu0 0.0
      %682 = vmatprep.subr.mxu0 0.0
      %683 = vmatpush1.msra.mxu0 0.0
      %684 = vmatprep.subr.mxu0 0.0
      %685 = vmatpush1.msra.mxu0 0.0
      %686 = vmatprep.subr.mxu0 0.0
      %687 = vmatpush1.msra.mxu0 0.0
      %688 = vmatprep.subr.mxu0 0.0
      %689 = vmatpush1.msra.mxu0 0.0
      %690 = vmatprep.subr.mxu0 0.0
      %691 = vmatpush1.msra.mxu0 0.0
      %692 = vmatprep.subr.mxu0 0.0
      %693 = vmatpush1.msra.mxu0 0.0
      %694 = vmatprep.subr.mxu0 0.0
      %695 = vmatpush1.msra.mxu0 0.0
      %696 = vmatprep.subr.mxu0 0.0
      %697 = vmatpush1.msra.mxu0 0.0
      %698 = vmatprep.subr.mxu0 0.0
      %699 = vmatpush1.msra.mxu0 %v570
      %700 = vmatprep.subr.mxu0 0.0
      %701 = vmatpush1.msra.mxu0 %v569
      %702 = vmatprep.subr.mxu0 0.0
      %703 = vmatpush1.msra.mxu0 %v568
      %704 = vmatprep.subr.mxu0 0.0
      %705 = vmatpush1.msra.mxu0 %v567
      %706 = vmatprep.subr.mxu0 0.0
      %707 = vmatpush2.msra.mxu0 0.0
      %708 = vmatprep.subr.mxu0 0.0
      %709 = vmatpush2.msra.mxu0 0.0
      %710 = vmatprep.subr.mxu0 0.0
      %711 = vmatpush2.msra.mxu0 0.0
      %712 = vmatprep.subr.mxu0 0.0
      %713 = vmatpush2.msra.mxu0 0.0
      %714 = vmatprep.subr.mxu0 0.0
      %715 = vmatpush2.msra.mxu0 0.0
      %716 = vmatprep.subr.mxu0 0.0
      %717 = vmatpush2.msra.mxu0 0.0
      %718 = vmatprep.subr.mxu0 0.0
      %719 = vmatpush2.msra.mxu0 0.0
      %720 = vmatprep.subr.mxu0 0.0
      %721 = vmatpush2.msra.mxu0 0.0
      %722 = vmatprep.subr.mxu0 0.0
      %723 = vmatpush2.msra.mxu0 0.0
      %724 = vmatprep.subr.mxu0 0.0
      %725 = vmatpush2.msra.mxu0 0.0
      %726 = vmatprep.subr.mxu0 0.0
      %727 = vmatpush2.msra.mxu0 0.0
      %728 = vmatprep.subr.mxu0 0.0
      %729 = vmatpush2.msra.mxu0 0.0
      %730 = vmatprep.subr.mxu0 0.0
      %731 = vmatpush2.msra.mxu0 0.0
      %732 = vmatprep.subr.mxu0 0.0
      %733 = vmatpush2.msra.mxu0 0.0
      %734 = vmatprep.subr.mxu0 0.0
      %735 = vmatpush2.msra.mxu0 0.0
      %736 = vmatprep.subr.mxu0 0.0
      %737 = vmatpush2.msra.mxu0 0.0
      %738 = vmatprep.mubr.f32.mxu0 0.0
      %739 = vmatmul.mubr.f32.gmra.mxu0 %v672
      %v740 = vpop.f32.mrf.mxu0
      %v741 = vadd.f32 0.0, %v740
      %v742 = vpop.f32.mrf.mxu0
      %743 = vdwg.mxu0
      %v744 = vadd.f32 %v534, %v741
      %v745 = vxor.u32 %v744, 2147483648
      %v746 = vmul.f32 %v745, 1.442695
      %v747 = vpow.pop %v746
      %v748 = vadd.f32 %v747, 1.0
      %v749 = vrcp.pop %v748
      %v750 = vmul.f32 1.0, %v749
      %v751 = vtanh.pop %v744
      %v752 = vmul.f32 %v750, %v662
      %754 = vrot.lane.b32.xlu0 %v751, 64
      %v755 = vpop.permute.xlu0 %754
      %v757 = vmul.f32 %v750, %v755
      %759 = vrot.lane.b32.xlu0 %v757, 32
      %v760 = vpop.permute.xlu0 %759
      %v762 = vadd.f32 %v752, %v760
      %v763 = vtanh.pop %v762
      %765 = vrot.lane.b32.xlu0 %v763, 64
      %v766 = vpop.permute.xlu0 %765
      %v768 = vmul.f32 %v750, %v766
      %770 = vrot.lane.b32.xlu0 %v768, 32
      %v771 = vpop.permute.xlu0 %770
      %v772 = vsel %vm345, %v771, 0
      %774 = vmatprep.subr.mxu0 0.0
      %775 = vmatpush1.msra.mxu0 0.0
      %776 = vmatprep.subr.mxu0 0.0
      %777 = vmatpush1.msra.mxu0 0.0
      %778 = vmatprep.subr.mxu0 0.0
      %779 = vmatpush1.msra.mxu0 0.0
      %780 = vmatprep.subr.mxu0 0.0
      %781 = vmatpush1.msra.mxu0 0.0
      %782 = vmatprep.subr.mxu0 0.0
      %783 = vmatpush1.msra.mxu0 0.0
      %784 = vmatprep.subr.mxu0 0.0
      %785 = vmatpush1.msra.mxu0 0.0
      %786 = vmatprep.subr.mxu0 0.0
      %787 = vmatpush1.msra.mxu0 0.0
      %788 = vmatprep.subr.mxu0 0.0
      %789 = vmatpush1.msra.mxu0 0.0
      %790 = vmatprep.subr.mxu0 0.0
      %791 = vmatpush1.msra.mxu0 0.0
      %792 = vmatprep.subr.mxu0 0.0
      %793 = vmatpush1.msra.mxu0 0.0
      %794 = vmatprep.subr.mxu0 0.0
      %795 = vmatpush1.msra.mxu0 0.0
      %796 = vmatprep.subr.mxu0 0.0
      %797 = vmatpush1.msra.mxu0 0.0
      %798 = vmatprep.subr.mxu0 0.0
      %799 = vmatpush1.msra.mxu0 %v570
      %800 = vmatprep.subr.mxu0 0.0
      %801 = vmatpush1.msra.mxu0 %v569
      %802 = vmatprep.subr.mxu0 0.0
      %803 = vmatpush1.msra.mxu0 %v568
      %804 = vmatprep.subr.mxu0 0.0
      %805 = vmatpush1.msra.mxu0 %v567
      %806 = vmatprep.subr.mxu0 0.0
      %807 = vmatpush2.msra.mxu0 0.0
      %808 = vmatprep.subr.mxu0 0.0
      %809 = vmatpush2.msra.mxu0 0.0
      %810 = vmatprep.subr.mxu0 0.0
      %811 = vmatpush2.msra.mxu0 0.0
      %812 = vmatprep.subr.mxu0 0.0
      %813 = vmatpush2.msra.mxu0 0.0
      %814 = vmatprep.subr.mxu0 0.0
      %815 = vmatpush2.msra.mxu0 0.0
      %816 = vmatprep.subr.mxu0 0.0
      %817 = vmatpush2.msra.mxu0 0.0
      %818 = vmatprep.subr.mxu0 0.0
      %819 = vmatpush2.msra.mxu0 0.0
      %820 = vmatprep.subr.mxu0 0.0
      %821 = vmatpush2.msra.mxu0 0.0
      %822 = vmatprep.subr.mxu0 0.0
      %823 = vmatpush2.msra.mxu0 0.0
      %824 = vmatprep.subr.mxu0 0.0
      %825 = vmatpush2.msra.mxu0 0.0
      %826 = vmatprep.subr.mxu0 0.0
      %827 = vmatpush2.msra.mxu0 0.0
      %828 = vmatprep.subr.mxu0 0.0
      %829 = vmatpush2.msra.mxu0 0.0
      %830 = vmatprep.subr.mxu0 0.0
      %831 = vmatpush2.msra.mxu0 0.0
      %832 = vmatprep.subr.mxu0 0.0
      %833 = vmatpush2.msra.mxu0 0.0
      %834 = vmatprep.subr.mxu0 0.0
      %835 = vmatpush2.msra.mxu0 0.0
      %836 = vmatprep.subr.mxu0 0.0
      %837 = vmatpush2.msra.mxu0 0.0
      %838 = vmatprep.mubr.f32.mxu0 0.0
      %839 = vmatmul.mubr.f32.gmra.mxu0 %v772
      %v840 = vpop.f32.mrf.mxu0
      %v841 = vadd.f32 0.0, %v840
      %v842 = vpop.f32.mrf.mxu0
      %843 = vdwg.mxu0
      %v844 = vadd.f32 %v539, %v841
      %v845 = vxor.u32 %v844, 2147483648
      %v846 = vmul.f32 %v845, 1.442695
      %v847 = vpow.pop %v846
      %v848 = vadd.f32 %v847, 1.0
      %v849 = vrcp.pop %v848
      %v850 = vmul.f32 1.0, %v849
      %v851 = vtanh.pop %v844
      %v852 = vmul.f32 %v850, %v762
      %854 = vrot.lane.b32.xlu0 %v851, 64
      %v855 = vpop.permute.xlu0 %854
      %v857 = vmul.f32 %v850, %v855
      %859 = vrot.lane.b32.xlu0 %v857, 32
      %v860 = vpop.permute.xlu0 %859
      %v862 = vadd.f32 %v852, %v860
      %v863 = vtanh.pop %v862
      %865 = vrot.lane.b32.xlu0 %v863, 64
      %v866 = vpop.permute.xlu0 %865
      %v868 = vmul.f32 %v850, %v866
      %870 = vrot.lane.b32.xlu0 %v868, 32
      %v871 = vpop.permute.xlu0 %870
      %v872 = vsel %vm345, %v871, 0
      %874 = vmatprep.subr.mxu0 0.0
      %875 = vmatpush1.msra.mxu0 0.0
      %876 = vmatprep.subr.mxu0 0.0
      %877 = vmatpush1.msra.mxu0 0.0
      %878 = vmatprep.subr.mxu0 0.0
      %879 = vmatpush1.msra.mxu0 0.0
      %880 = vmatprep.subr.mxu0 0.0
      %881 = vmatpush1.msra.mxu0 0.0
      %882 = vmatprep.subr.mxu0 0.0
      %883 = vmatpush1.msra.mxu0 0.0
      %884 = vmatprep.subr.mxu0 0.0
      %885 = vmatpush1.msra.mxu0 0.0
      %886 = vmatprep.subr.mxu0 0.0
      %887 = vmatpush1.msra.mxu0 0.0
      %888 = vmatprep.subr.mxu0 0.0
      %889 = vmatpush1.msra.mxu0 0.0
      %890 = vmatprep.subr.mxu0 0.0
      %891 = vmatpush1.msra.mxu0 0.0
      %892 = vmatprep.subr.mxu0 0.0
      %893 = vmatpush1.msra.mxu0 0.0
      %894 = vmatprep.subr.mxu0 0.0
      %895 = vmatpush1.msra.mxu0 0.0
      %896 = vmatprep.subr.mxu0 0.0
      %897 = vmatpush1.msra.mxu0 0.0
      %898 = vmatprep.subr.mxu0 0.0
      %899 = vmatpush1.msra.mxu0 %v570
      %900 = vmatprep.subr.mxu0 0.0
      %901 = vmatpush1.msra.mxu0 %v569
      %902 = vmatprep.subr.mxu0 0.0
      %903 = vmatpush1.msra.mxu0 %v568
      %904 = vmatprep.subr.mxu0 0.0
      %905 = vmatpush1.msra.mxu0 %v567
      %906 = vmatprep.subr.mxu0 0.0
      %907 = vmatpush2.msra.mxu0 0.0
      %908 = vmatprep.subr.mxu0 0.0
      %909 = vmatpush2.msra.mxu0 0.0
      %910 = vmatprep.subr.mxu0 0.0
      %911 = vmatpush2.msra.mxu0 0.0
      %912 = vmatprep.subr.mxu0 0.0
      %913 = vmatpush2.msra.mxu0 0.0
      %914 = vmatprep.subr.mxu0 0.0
      %915 = vmatpush2.msra.mxu0 0.0
      %916 = vmatprep.subr.mxu0 0.0
      %917 = vmatpush2.msra.mxu0 0.0
      %918 = vmatprep.subr.mxu0 0.0
      %919 = vmatpush2.msra.mxu0 0.0
      %920 = vmatprep.subr.mxu0 0.0
      %921 = vmatpush2.msra.mxu0 0.0
      %922 = vmatprep.subr.mxu0 0.0
      %923 = vmatpush2.msra.mxu0 0.0
      %924 = vmatprep.subr.mxu0 0.0
      %925 = vmatpush2.msra.mxu0 0.0
      %926 = vmatprep.subr.mxu0 0.0
      %927 = vmatpush2.msra.mxu0 0.0
      %928 = vmatprep.subr.mxu0 0.0
      %929 = vmatpush2.msra.mxu0 0.0
      %930 = vmatprep.subr.mxu0 0.0
      %931 = vmatpush2.msra.mxu0 0.0
      %932 = vmatprep.subr.mxu0 0.0
      %933 = vmatpush2.msra.mxu0 0.0
      %934 = vmatprep.subr.mxu0 0.0
      %935 = vmatpush2.msra.mxu0 0.0
      %936 = vmatprep.subr.mxu0 0.0
      %937 = vmatpush2.msra.mxu0 0.0
      %938 = vmatprep.mubr.f32.mxu0 0.0
      %939 = vmatmul.mubr.f32.gmra.mxu0 %v872
      %v940 = vpop.f32.mrf.mxu0
      %v941 = vadd.f32 0.0, %v940
      %v942 = vpop.f32.mrf.mxu0
      %943 = vdwg.mxu0
      %v944 = vadd.f32 %v544, %v941
      %v945 = vxor.u32 %v944, 2147483648
      %v946 = vmul.f32 %v945, 1.442695
      %v947 = vpow.pop %v946
      %v948 = vadd.f32 %v947, 1.0
      %v949 = vrcp.pop %v948
      %v950 = vmul.f32 1.0, %v949
      %v951 = vtanh.pop %v944
      %v952 = vmul.f32 %v950, %v862
      %954 = vrot.lane.b32.xlu0 %v951, 64
      %v955 = vpop.permute.xlu0 %954
      %v957 = vmul.f32 %v950, %v955
      %959 = vrot.lane.b32.xlu0 %v957, 32
      %v960 = vpop.permute.xlu0 %959
      %v962 = vadd.f32 %v952, %v960
      %v963 = vtanh.pop %v962
      %965 = vrot.lane.b32.xlu0 %v963, 64
      %v966 = vpop.permute.xlu0 %965
      %v968 = vmul.f32 %v950, %v966
      %970 = vrot.lane.b32.xlu0 %v968, 32
      %v971 = vpop.permute.xlu0 %970
      %v972 = vsel %vm345, %v971, 0
      %974 = vmatprep.subr.mxu0 0.0
      %975 = vmatpush1.msra.mxu0 0.0
      %976 = vmatprep.subr.mxu0 0.0
      %977 = vmatpush1.msra.mxu0 0.0
      %978 = vmatprep.subr.mxu0 0.0
      %979 = vmatpush1.msra.mxu0 0.0
      %980 = vmatprep.subr.mxu0 0.0
      %981 = vmatpush1.msra.mxu0 0.0
      %982 = vmatprep.subr.mxu0 0.0
      %983 = vmatpush1.msra.mxu0 0.0
      %984 = vmatprep.subr.mxu0 0.0
      %985 = vmatpush1.msra.mxu0 0.0
      %986 = vmatprep.subr.mxu0 0.0
      %987 = vmatpush1.msra.mxu0 0.0
      %988 = vmatprep.subr.mxu0 0.0
      %989 = vmatpush1.msra.mxu0 0.0
      %990 = vmatprep.subr.mxu0 0.0
      %991 = vmatpush1.msra.mxu0 0.0
      %992 = vmatprep.subr.mxu0 0.0
      %993 = vmatpush1.msra.mxu0 0.0
      %994 = vmatprep.subr.mxu0 0.0
      %995 = vmatpush1.msra.mxu0 0.0
      %996 = vmatprep.subr.mxu0 0.0
      %997 = vmatpush1.msra.mxu0 0.0
      %998 = vmatprep.subr.mxu0 0.0
      %999 = vmatpush1.msra.mxu0 %v570
      %1000 = vmatprep.subr.mxu0 0.0
      %1001 = vmatpush1.msra.mxu0 %v569
      %1002 = vmatprep.subr.mxu0 0.0
      %1003 = vmatpush1.msra.mxu0 %v568
      %1004 = vmatprep.subr.mxu0 0.0
      %1005 = vmatpush1.msra.mxu0 %v567
      %1006 = vmatprep.subr.mxu0 0.0
      %1007 = vmatpush2.msra.mxu0 0.0
      %1008 = vmatprep.subr.mxu0 0.0
      %1009 = vmatpush2.msra.mxu0 0.0
      %1010 = vmatprep.subr.mxu0 0.0
      %1011 = vmatpush2.msra.mxu0 0.0
      %1012 = vmatprep.subr.mxu0 0.0
      %1013 = vmatpush2.msra.mxu0 0.0
      %1014 = vmatprep.subr.mxu0 0.0
      %1015 = vmatpush2.msra.mxu0 0.0
      %1016 = vmatprep.subr.mxu0 0.0
      %1017 = vmatpush2.msra.mxu0 0.0
      %1018 = vmatprep.subr.mxu0 0.0
      %1019 = vmatpush2.msra.mxu0 0.0
      %1020 = vmatprep.subr.mxu0 0.0
      %1021 = vmatpush2.msra.mxu0 0.0
      %1022 = vmatprep.subr.mxu0 0.0
      %1023 = vmatpush2.msra.mxu0 0.0
      %1024 = vmatprep.subr.mxu0 0.0
      %1025 = vmatpush2.msra.mxu0 0.0
      %1026 = vmatprep.subr.mxu0 0.0
      %1027 = vmatpush2.msra.mxu0 0.0
      %1028 = vmatprep.subr.mxu0 0.0
      %1029 = vmatpush2.msra.mxu0 0.0
      %1030 = vmatprep.subr.mxu0 0.0
      %1031 = vmatpush2.msra.mxu0 0.0
      %1032 = vmatprep.subr.mxu0 0.0
      %1033 = vmatpush2.msra.mxu0 0.0
      %1034 = vmatprep.subr.mxu0 0.0
      %1035 = vmatpush2.msra.mxu0 0.0
      %1036 = vmatprep.subr.mxu0 0.0
      %1037 = vmatpush2.msra.mxu0 0.0
      %1038 = vmatprep.mubr.f32.mxu0 0.0
      %1039 = vmatmul.mubr.f32.gmra.mxu0 %v972
      %v1040 = vpop.f32.mrf.mxu0
      %v1041 = vadd.f32 0.0, %v1040
      %v1042 = vpop.f32.mrf.mxu0
      %1043 = vdwg.mxu0
      %v1044 = vadd.f32 %v549, %v1041
      %v1045 = vxor.u32 %v1044, 2147483648
      %v1046 = vmul.f32 %v1045, 1.442695
      %v1047 = vpow.pop %v1046
      %v1048 = vadd.f32 %v1047, 1.0
      %v1049 = vrcp.pop %v1048
      %v1050 = vmul.f32 1.0, %v1049
      %v1051 = vtanh.pop %v1044
      %v1052 = vmul.f32 %v1050, %v962
      %1054 = vrot.lane.b32.xlu0 %v1051, 64
      %v1055 = vpop.permute.xlu0 %1054
      %v1057 = vmul.f32 %v1050, %v1055
      %1059 = vrot.lane.b32.xlu0 %v1057, 32
      %v1060 = vpop.permute.xlu0 %1059
      %v1062 = vadd.f32 %v1052, %v1060
      %v1063 = vtanh.pop %v1062
      %1065 = vrot.lane.b32.xlu0 %v1063, 64
      %v1066 = vpop.permute.xlu0 %1065
      %v1068 = vmul.f32 %v1050, %v1066
      %1070 = vrot.lane.b32.xlu0 %v1068, 32
      %v1071 = vpop.permute.xlu0 %1070
      %v1072 = vsel %vm345, %v1071, 0
      %1074 = vmatprep.subr.mxu0 0.0
      %1075 = vmatpush1.msra.mxu0 0.0
      %1076 = vmatprep.subr.mxu0 0.0
      %1077 = vmatpush1.msra.mxu0 0.0
      %1078 = vmatprep.subr.mxu0 0.0
      %1079 = vmatpush1.msra.mxu0 0.0
      %1080 = vmatprep.subr.mxu0 0.0
      %1081 = vmatpush1.msra.mxu0 0.0
      %1082 = vmatprep.subr.mxu0 0.0
      %1083 = vmatpush1.msra.mxu0 0.0
      %1084 = vmatprep.subr.mxu0 0.0
      %1085 = vmatpush1.msra.mxu0 0.0
      %1086 = vmatprep.subr.mxu0 0.0
      %1087 = vmatpush1.msra.mxu0 0.0
      %1088 = vmatprep.subr.mxu0 0.0
      %1089 = vmatpush1.msra.mxu0 0.0
      %1090 = vmatprep.subr.mxu0 0.0
      %1091 = vmatpush1.msra.mxu0 0.0
      %1092 = vmatprep.subr.mxu0 0.0
      %1093 = vmatpush1.msra.mxu0 0.0
      %1094 = vmatprep.subr.mxu0 0.0
      %1095 = vmatpush1.msra.mxu0 0.0
      %1096 = vmatprep.subr.mxu0 0.0
      %1097 = vmatpush1.msra.mxu0 0.0
      %1098 = vmatprep.subr.mxu0 0.0
      %1099 = vmatpush1.msra.mxu0 %v570
      %1100 = vmatprep.subr.mxu0 0.0
      %1101 = vmatpush1.msra.mxu0 %v569
      %1102 = vmatprep.subr.mxu0 0.0
      %1103 = vmatpush1.msra.mxu0 %v568
      %1104 = vmatprep.subr.mxu0 0.0
      %1105 = vmatpush1.msra.mxu0 %v567
      %1106 = vmatprep.subr.mxu0 0.0
      %1107 = vmatpush2.msra.mxu0 0.0
      %1108 = vmatprep.subr.mxu0 0.0
      %1109 = vmatpush2.msra.mxu0 0.0
      %1110 = vmatprep.subr.mxu0 0.0
      %1111 = vmatpush2.msra.mxu0 0.0
      %1112 = vmatprep.subr.mxu0 0.0
      %1113 = vmatpush2.msra.mxu0 0.0
      %1114 = vmatprep.subr.mxu0 0.0
      %1115 = vmatpush2.msra.mxu0 0.0
      %1116 = vmatprep.subr.mxu0 0.0
      %1117 = vmatpush2.msra.mxu0 0.0
      %1118 = vmatprep.subr.mxu0 0.0
      %1119 = vmatpush2.msra.mxu0 0.0
      %1120 = vmatprep.subr.mxu0 0.0
      %1121 = vmatpush2.msra.mxu0 0.0
      %1122 = vmatprep.subr.mxu0 0.0
      %1123 = vmatpush2.msra.mxu0 0.0
      %1124 = vmatprep.subr.mxu0 0.0
      %1125 = vmatpush2.msra.mxu0 0.0
      %1126 = vmatprep.subr.mxu0 0.0
      %1127 = vmatpush2.msra.mxu0 0.0
      %1128 = vmatprep.subr.mxu0 0.0
      %1129 = vmatpush2.msra.mxu0 0.0
      %1130 = vmatprep.subr.mxu0 0.0
      %1131 = vmatpush2.msra.mxu0 0.0
      %1132 = vmatprep.subr.mxu0 0.0
      %1133 = vmatpush2.msra.mxu0 0.0
      %1134 = vmatprep.subr.mxu0 0.0
      %1135 = vmatpush2.msra.mxu0 0.0
      %1136 = vmatprep.subr.mxu0 0.0
      %1137 = vmatpush2.msra.mxu0 0.0
      %1138 = vmatprep.mubr.f32.mxu0 0.0
      %1139 = vmatmul.mubr.f32.gmra.mxu0 %v1072
      %v1140 = vpop.f32.mrf.mxu0
      %v1141 = vadd.f32 0.0, %v1140
      %v1142 = vpop.f32.mrf.mxu0
      %1143 = vdwg.mxu0
      %v1144 = vadd.f32 %v554, %v1141
      %v1145 = vxor.u32 %v1144, 2147483648
      %v1146 = vmul.f32 %v1145, 1.442695
      %v1147 = vpow.pop %v1146
      %v1148 = vadd.f32 %v1147, 1.0
      %v1149 = vrcp.pop %v1148
      %v1150 = vmul.f32 1.0, %v1149
      %v1151 = vtanh.pop %v1144
      %v1152 = vmul.f32 %v1150, %v1062
      %1154 = vrot.lane.b32.xlu0 %v1151, 64
      %v1155 = vpop.permute.xlu0 %1154
      %v1157 = vmul.f32 %v1150, %v1155
      %1159 = vrot.lane.b32.xlu0 %v1157, 32
      %v1160 = vpop.permute.xlu0 %1159
      %v1162 = vadd.f32 %v1152, %v1160
      %v1163 = vtanh.pop %v1162
      %1165 = vrot.lane.b32.xlu0 %v1163, 64
      %v1166 = vpop.permute.xlu0 %1165
      %v1168 = vmul.f32 %v1150, %v1166
      %1170 = vrot.lane.b32.xlu0 %v1168, 32
      %v1171 = vpop.permute.xlu0 %1170
      %v1172 = vsel %vm345, %v1171, 0
      %1174 = vmatprep.subr.mxu0 0.0
      %1175 = vmatpush1.msra.mxu0 0.0
      %1176 = vmatprep.subr.mxu0 0.0
      %1177 = vmatpush1.msra.mxu0 0.0
      %1178 = vmatprep.subr.mxu0 0.0
      %1179 = vmatpush1.msra.mxu0 0.0
      %1180 = vmatprep.subr.mxu0 0.0
      %1181 = vmatpush1.msra.mxu0 0.0
      %1182 = vmatprep.subr.mxu0 0.0
      %1183 = vmatpush1.msra.mxu0 0.0
      %1184 = vmatprep.subr.mxu0 0.0
      %1185 = vmatpush1.msra.mxu0 0.0
      %1186 = vmatprep.subr.mxu0 0.0
      %1187 = vmatpush1.msra.mxu0 0.0
      %1188 = vmatprep.subr.mxu0 0.0
      %1189 = vmatpush1.msra.mxu0 0.0
      %1190 = vmatprep.subr.mxu0 0.0
      %1191 = vmatpush1.msra.mxu0 0.0
      %1192 = vmatprep.subr.mxu0 0.0
      %1193 = vmatpush1.msra.mxu0 0.0
      %1194 = vmatprep.subr.mxu0 0.0
      %1195 = vmatpush1.msra.mxu0 0.0
      %1196 = vmatprep.subr.mxu0 0.0
      %1197 = vmatpush1.msra.mxu0 0.0
      %1198 = vmatprep.subr.mxu0 0.0
      %1199 = vmatpush1.msra.mxu0 %v570
      %1200 = vmatprep.subr.mxu0 0.0
      %1201 = vmatpush1.msra.mxu0 %v569
      %1202 = vmatprep.subr.mxu0 0.0
      %1203 = vmatpush1.msra.mxu0 %v568
      %1204 = vmatprep.subr.mxu0 0.0
      %1205 = vmatpush1.msra.mxu0 %v567
      %1206 = vmatprep.subr.mxu0 0.0
      %1207 = vmatpush2.msra.mxu0 0.0
      %1208 = vmatprep.subr.mxu0 0.0
      %1209 = vmatpush2.msra.mxu0 0.0
      %1210 = vmatprep.subr.mxu0 0.0
      %1211 = vmatpush2.msra.mxu0 0.0
      %1212 = vmatprep.subr.mxu0 0.0
      %1213 = vmatpush2.msra.mxu0 0.0
      %1214 = vmatprep.subr.mxu0 0.0
      %1215 = vmatpush2.msra.mxu0 0.0
      %1216 = vmatprep.subr.mxu0 0.0
      %1217 = vmatpush2.msra.mxu0 0.0
      %1218 = vmatprep.subr.mxu0 0.0
      %1219 = vmatpush2.msra.mxu0 0.0
      %1220 = vmatprep.subr.mxu0 0.0
      %1221 = vmatpush2.msra.mxu0 0.0
      %1222 = vmatprep.subr.mxu0 0.0
      %1223 = vmatpush2.msra.mxu0 0.0
      %1224 = vmatprep.subr.mxu0 0.0
      %1225 = vmatpush2.msra.mxu0 0.0
      %1226 = vmatprep.subr.mxu0 0.0
      %1227 = vmatpush2.msra.mxu0 0.0
      %1228 = vmatprep.subr.mxu0 0.0
      %1229 = vmatpush2.msra.mxu0 0.0
      %1230 = vmatprep.subr.mxu0 0.0
      %1231 = vmatpush2.msra.mxu0 0.0
      %1232 = vmatprep.subr.mxu0 0.0
      %1233 = vmatpush2.msra.mxu0 0.0
      %1234 = vmatprep.subr.mxu0 0.0
      %1235 = vmatpush2.msra.mxu0 0.0
      %1236 = vmatprep.subr.mxu0 0.0
      %1237 = vmatpush2.msra.mxu0 0.0
      %1238 = vmatprep.mubr.f32.mxu0 0.0
      %1239 = vmatmul.mubr.f32.gmra.mxu0 %v1172
      %v1240 = vpop.f32.mrf.mxu0
      %v1241 = vadd.f32 0.0, %v1240
      %v1242 = vpop.f32.mrf.mxu0
      %1243 = vdwg.mxu0
      %v1244 = vadd.f32 %v559, %v1241
      %v1245 = vxor.u32 %v1244, 2147483648
      %v1246 = vmul.f32 %v1245, 1.442695
      %v1247 = vpow.pop %v1246
      %v1248 = vadd.f32 %v1247, 1.0
      %v1249 = vrcp.pop %v1248
      %v1250 = vmul.f32 1.0, %v1249
      %v1251 = vtanh.pop %v1244
      %v1252 = vmul.f32 %v1250, %v1162
      %1254 = vrot.lane.b32.xlu0 %v1251, 64
      %v1255 = vpop.permute.xlu0 %1254
      %v1257 = vmul.f32 %v1250, %v1255
      %1259 = vrot.lane.b32.xlu0 %v1257, 32
      %v1260 = vpop.permute.xlu0 %1259
      %v1262 = vadd.f32 %v1252, %v1260
      %v1263 = vtanh.pop %v1262
      %1265 = vrot.lane.b32.xlu0 %v1263, 64
      %v1266 = vpop.permute.xlu0 %1265
      %v1268 = vmul.f32 %v1250, %v1266
      %1270 = vrot.lane.b32.xlu0 %v1268, 32
      %v1271 = vpop.permute.xlu0 %1270
      %v1272 = vsel %vm345, %v1271, 0
      %1274 = vmatprep.subr.mxu0 0.0
      %1275 = vmatpush1.msra.mxu0 0.0
      %1276 = vmatprep.subr.mxu0 0.0
      %1277 = vmatpush1.msra.mxu0 0.0
      %1278 = vmatprep.subr.mxu0 0.0
      %1279 = vmatpush1.msra.mxu0 0.0
      %1280 = vmatprep.subr.mxu0 0.0
      %1281 = vmatpush1.msra.mxu0 0.0
      %1282 = vmatprep.subr.mxu0 0.0
      %1283 = vmatpush1.msra.mxu0 0.0
      %1284 = vmatprep.subr.mxu0 0.0
      %1285 = vmatpush1.msra.mxu0 0.0
      %1286 = vmatprep.subr.mxu0 0.0
      %1287 = vmatpush1.msra.mxu0 0.0
      %1288 = vmatprep.subr.mxu0 0.0
      %1289 = vmatpush1.msra.mxu0 0.0
      %1290 = vmatprep.subr.mxu0 0.0
      %1291 = vmatpush1.msra.mxu0 0.0
      %1292 = vmatprep.subr.mxu0 0.0
      %1293 = vmatpush1.msra.mxu0 0.0
      %1294 = vmatprep.subr.mxu0 0.0
      %1295 = vmatpush1.msra.mxu0 0.0
      %1296 = vmatprep.subr.mxu0 0.0
      %1297 = vmatpush1.msra.mxu0 0.0
      %1298 = vmatprep.subr.mxu0 0.0
      %1299 = vmatpush1.msra.mxu0 %v570
      %1300 = vmatprep.subr.mxu0 0.0
      %1301 = vmatpush1.msra.mxu0 %v569
      %1302 = vmatprep.subr.mxu0 0.0
      %1303 = vmatpush1.msra.mxu0 %v568
      %1304 = vmatprep.subr.mxu0 0.0
      %1305 = vmatpush1.msra.mxu0 %v567
      %1306 = vmatprep.subr.mxu0 0.0
      %1307 = vmatpush2.msra.mxu0 0.0
      %1308 = vmatprep.subr.mxu0 0.0
      %1309 = vmatpush2.msra.mxu0 0.0
      %1310 = vmatprep.subr.mxu0 0.0
      %1311 = vmatpush2.msra.mxu0 0.0
      %1312 = vmatprep.subr.mxu0 0.0
      %1313 = vmatpush2.msra.mxu0 0.0
      %1314 = vmatprep.subr.mxu0 0.0
      %1315 = vmatpush2.msra.mxu0 0.0
      %1316 = vmatprep.subr.mxu0 0.0
      %1317 = vmatpush2.msra.mxu0 0.0
      %1318 = vmatprep.subr.mxu0 0.0
      %1319 = vmatpush2.msra.mxu0 0.0
      %1320 = vmatprep.subr.mxu0 0.0
      %1321 = vmatpush2.msra.mxu0 0.0
      %1322 = vmatprep.subr.mxu0 0.0
      %1323 = vmatpush2.msra.mxu0 0.0
      %1324 = vmatprep.subr.mxu0 0.0
      %1325 = vmatpush2.msra.mxu0 0.0
      %1326 = vmatprep.subr.mxu0 0.0
      %1327 = vmatpush2.msra.mxu0 0.0
      %1328 = vmatprep.subr.mxu0 0.0
      %1329 = vmatpush2.msra.mxu0 0.0
      %1330 = vmatprep.subr.mxu0 0.0
      %1331 = vmatpush2.msra.mxu0 0.0
      %1332 = vmatprep.subr.mxu0 0.0
      %1333 = vmatpush2.msra.mxu0 0.0
      %1334 = vmatprep.subr.mxu0 0.0
      %1335 = vmatpush2.msra.mxu0 0.0
      %1336 = vmatprep.subr.mxu0 0.0
      %1337 = vmatpush2.msra.mxu0 0.0
      %1338 = vmatprep.mubr.f32.mxu0 0.0
      %1339 = vmatmul.mubr.f32.gmra.mxu0 %v1272
      %v1340 = vpop.f32.mrf.mxu0
      %v1341 = vadd.f32 0.0, %v1340
      %v1342 = vpop.f32.mrf.mxu0
      %1343 = vdwg.mxu0
      %v1344 = vadd.f32 %v564, %v1341
      %v1345 = vxor.u32 %v1344, 2147483648
      %v1346 = vmul.f32 %v1345, 1.442695
      %v1347 = vpow.pop %v1346
      %v1348 = vadd.f32 %v1347, 1.0
      %v1349 = vrcp.pop %v1348
      %v1350 = vmul.f32 1.0, %v1349
      %v1351 = vtanh.pop %v1344
      %v1352 = vmul.f32 %v1350, %v1262
      %1354 = vrot.lane.b32.xlu0 %v1351, 64
      %v1355 = vpop.permute.xlu0 %1354
      %v1357 = vmul.f32 %v1350, %v1355
      %1359 = vrot.lane.b32.xlu0 %v1357, 32
      %v1360 = vpop.permute.xlu0 %1359
      %v1362 = vadd.f32 %v1352, %v1360
      %v1363 = vtanh.pop %v1362
      %1365 = vrot.lane.b32.xlu0 %v1363, 64
      %v1366 = vpop.permute.xlu0 %1365
      %v1368 = vmul.f32 %v1350, %v1366
      %v1369 = vld [vmem:[%s337] sm:$0xff]
      %v1370 = vld [vmem:[%s337 + $0x8] sm:$0xff]
      %v1371 = vld [vmem:[%s337 + $0x10] sm:$0xff]
      %v1372 = vld [vmem:[%s337 + $0x18] sm:$0xff]
      %v1373 = vld [vmem:[%s340] sm:$0x1]
      %v1375 = vlaneseq
      %v1376 = vshrl.u32 %v1375, 7
      %v1377 = vsub.s32 0, %v1376
      %v1378 = vrot.slane %v1373, %v1377
      %1381 = vrot.lane.b32.xlu0 %v1368, 32
      %v1382 = vpop.permute.xlu0 %1381
      %v1383 = vsel %vm345, %v1382, 0
      %1385 = vmatprep.subr.mxu0 0.0
      %1386 = vmatpush1.msra.mxu0 0.0
      %1387 = vmatprep.subr.mxu0 0.0
      %1388 = vmatpush1.msra.mxu0 0.0
      %1389 = vmatprep.subr.mxu0 0.0
      %1390 = vmatpush1.msra.mxu0 0.0
      %1391 = vmatprep.subr.mxu0 0.0
      %1392 = vmatpush1.msra.mxu0 0.0
      %1393 = vmatprep.subr.mxu0 0.0
      %1394 = vmatpush1.msra.mxu0 0.0
      %1395 = vmatprep.subr.mxu0 0.0
      %1396 = vmatpush1.msra.mxu0 0.0
      %1397 = vmatprep.subr.mxu0 0.0
      %1398 = vmatpush1.msra.mxu0 0.0
      %1399 = vmatprep.subr.mxu0 0.0
      %1400 = vmatpush1.msra.mxu0 0.0
      %1401 = vmatprep.subr.mxu0 0.0
      %1402 = vmatpush1.msra.mxu0 0.0
      %1403 = vmatprep.subr.mxu0 0.0
      %1404 = vmatpush1.msra.mxu0 0.0
      %1405 = vmatprep.subr.mxu0 0.0
      %1406 = vmatpush1.msra.mxu0 0.0
      %1407 = vmatprep.subr.mxu0 0.0
      %1408 = vmatpush1.msra.mxu0 0.0
      %1409 = vmatprep.subr.mxu0 0.0
      %1410 = vmatpush1.msra.mxu0 %v1372
      %1411 = vmatprep.subr.mxu0 0.0
      %1412 = vmatpush1.msra.mxu0 %v1371
      %1413 = vmatprep.subr.mxu0 0.0
      %1414 = vmatpush1.msra.mxu0 %v1370
      %1415 = vmatprep.subr.mxu0 0.0
      %1416 = vmatpush1.msra.mxu0 %v1369
      %1417 = vmatprep.subr.mxu0 0.0
      %1418 = vmatpush2.msra.mxu0 0.0
      %1419 = vmatprep.subr.mxu0 0.0
      %1420 = vmatpush2.msra.mxu0 0.0
      %1421 = vmatprep.subr.mxu0 0.0
      %1422 = vmatpush2.msra.mxu0 0.0
      %1423 = vmatprep.subr.mxu0 0.0
      %1424 = vmatpush2.msra.mxu0 0.0
      %1425 = vmatprep.subr.mxu0 0.0
      %1426 = vmatpush2.msra.mxu0 0.0
      %1427 = vmatprep.subr.mxu0 0.0
      %1428 = vmatpush2.msra.mxu0 0.0
      %1429 = vmatprep.subr.mxu0 0.0
      %1430 = vmatpush2.msra.mxu0 0.0
      %1431 = vmatprep.subr.mxu0 0.0
      %1432 = vmatpush2.msra.mxu0 0.0
      %1433 = vmatprep.subr.mxu0 0.0
      %1434 = vmatpush2.msra.mxu0 0.0
      %1435 = vmatprep.subr.mxu0 0.0
      %1436 = vmatpush2.msra.mxu0 0.0
      %1437 = vmatprep.subr.mxu0 0.0
      %1438 = vmatpush2.msra.mxu0 0.0
      %1439 = vmatprep.subr.mxu0 0.0
      %1440 = vmatpush2.msra.mxu0 0.0
      %1441 = vmatprep.subr.mxu0 0.0
      %1442 = vmatpush2.msra.mxu0 0.0
      %1443 = vmatprep.subr.mxu0 0.0
      %1444 = vmatpush2.msra.mxu0 0.0
      %1445 = vmatprep.subr.mxu0 0.0
      %1446 = vmatpush2.msra.mxu0 0.0
      %1447 = vmatprep.subr.mxu0 0.0
      %1448 = vmatpush2.msra.mxu0 0.0
      %1449 = vmatprep.mubr.f32.mxu0 0.0
      %1450 = vmatmul.mubr.f32.gmra.mxu0 %v1383
      %v1451 = vpop.f32.mrf.mxu0
      %v1452 = vadd.f32 %v1378, %v1451
      %v1453 = vpop.f32.mrf.mxu0
      %1454 = vdwg.mxu0
      %vm1455 = vcmask 15360
      %1456 = vst.msk [vmem:[%s344] sm:$0xff] %vm1455, %v1452
      %p1457 = scmp.lt.s32.totalorder %s24, 1
      %s1458 = scalar_select %p1457, %s24, 1
      %s1459 = smul.addr %s1458, 8
      %s1460 = scalar_lea.vmem %s7, %s1459
      // Predicated region
      $region45: #{critic_forward_all.1} parent=43 // pred_check
        %p1461 = pneg %p198
      $region46: #{critic_forward_all.1} parent=43 // pred_check_branch
        %1463 = sbr.rel (%p1461) target = $region48
      $region47: #{critic_forward_all.1} parent=43 // pred_region
        _
      $region48: #{critic_forward_all.1} parent=43 // pred_fallthru
        _
    $region44: #{critic_forward_all.1} parent=5 // pred_fallthru
      _
    %p1464 = scmp.le.s32.totalorder 2, %s19
    // Predicated region
    $region49: #{critic_forward_all.1} parent=5 // pred_check
      %p1465 = pneg %p1464
    $region50: #{critic_forward_all.1} parent=5 // pred_check_branch
      %1467 = sbr.rel (%p1465) target = $region52
    $region51: #{critic_forward_all.1} parent=5 // pred_region
      %s1468 = ssub.s32 %s19, 2
      // Predicated region
      $region53: #{critic_forward_all.1} parent=51 // pred_check
        %p1469 = pneg %p204
      $region54: #{critic_forward_all.1} parent=51 // pred_check_branch
        %1471 = sbr.rel (%p1469) target = $region56
      $region55: #{critic_forward_all.1} parent=51 // pred_region
        %p1472 = scmp.lt.s32.totalorder %s25, 1
        %s1473 = scalar_select %p1472, %s25, 1
        %s1474 = smul.addr %s1473, 8
        %s1475 = scalar_lea.vmem %s7, %s1474
      $region56: #{critic_forward_all.1} parent=51 // pred_fallthru
        _
    $region52: #{critic_forward_all.1} parent=5 // pred_fallthru
      _
  $region6: #{critic_forward_all.1} parent=0 // loop_footer
    %s23 = sadd.s32 1, %s19
  $region7: #{critic_forward_all.1} parent=0 // loop_footer_branch
    %18 = sbr.rel target = $region3
  $region8: #{critic_forward_all.1} parent=0 // loop_exit
    _

</llo_original>
